<compile_context>
chip_gen: v6e
topology: v6e:2x2x1
jax: 0.10.0
libtpu: 0.0.40
codegen_flags: <defaults>
</compile_context>

<pallas_src>
import jax
import jax.numpy as jnp
from jax.experimental import pallas as pl
from jax.experimental.pallas import tpu as pltpu


# ----------------------------------------------------------------------------
# Pallas kernels
# ----------------------------------------------------------------------------

def _downsample_conv_kernel(xm_ref, xh_ref, w01_ref, w2_ref, b_ref, o_ref):
    # xm_ref : (2*th, Wp2, 2*Cin) bf16  -- rows [2*t0, 2*t0 + 2*th) of the padded
    #          image, adjacent columns paired into the lane dim:
    #          xm[r, j, k] == x_pad[2*t0 + r, 2*j + (k >= Cin), k % Cin]
    # xh_ref : (1, Wp2, 2*Cin)   bf16  -- halo row 2*t0 + 2*th
    # w01_ref: (3, 2*Cin, Cout)  bf16  -- [W[dy,0]; W[dy,1]] stacked along K
    # w2_ref : (3, Cin, Cout)    bf16  -- W[dy,2]
    # b_ref  : (1, Cout)         f32
    # o_ref  : (th*Wo, Cout)     f32
    two_th, wp2, twoc = xm_ref.shape
    th = two_th // 2
    c = twoc // 2
    mo, cout = o_ref.shape
    wo = mo // th

    # In-kernel stride-2 row-phase split (leading-dim reshape / slices only).
    x4 = xm_ref[...].reshape(th, 2, wp2, twoc)
    even = x4[:, 0]                                   # rows 2*oy      (dy=0)
    odd = x4[:, 1]                                    # rows 2*oy + 1  (dy=1)
    if th > 1:
        even2 = jnp.concatenate([x4[1:, 0], xh_ref[...]], axis=0)   # rows 2*oy+2
    else:
        even2 = xh_ref[...]
    rows = (even, odd, even2)

    acc = jnp.zeros((mo, cout), jnp.float32)
    for dy in range(3):
        r = rows[dy]
        # dx = 0,1 taps fused along K (K = 2*Cin).
        l01 = r[:, :wo, :].reshape(mo, twoc)
        acc += jnp.dot(l01, w01_ref[dy], preferred_element_type=jnp.float32)
        # dx = 2 tap: same rows shifted by one column pair, even half lanes only.
        l2 = r[:, 1:wo + 1, :c].reshape(mo, c)
        acc += jnp.dot(l2, w2_ref[dy], preferred_element_type=jnp.float32)

    acc += b_ref[...].astype(jnp.float32)
    o_ref[...] = acc.astype(o_ref.dtype)


def _avg_pool2x2_kernel(x_ref, o_ref):
    # x_ref: (2*th, Wo, 2*C) f32 column-paired input; o_ref: (th*Wo, C) f32.
    two_th, wo, twoc = x_ref.shape
    th = two_th // 2
    c = twoc // 2
    x4 = x_ref[...].astype(jnp.float32).reshape(th, 2, wo, twoc)
    s = x4[:, 0] + x4[:, 1]                            # row pairs
    o = (s[..., :c] + s[..., c:]) * 0.25               # column pairs (lane halves)
    o_ref[...] = o.reshape(th * wo, c).astype(o_ref.dtype)


# ----------------------------------------------------------------------------
# Tiling / budget helpers
# ----------------------------------------------------------------------------

def _round_up(x, m):
    return ((x + m - 1) // m) * m


def _vmem_capacity_bytes():
    try:
        return int(pltpu.get_tpu_info().vmem_capacity_bytes)
    except Exception:
        return 64 << 20          # conservative (v7x-sized) default


def _budgets():
    # (per-step block budget, vmem_limit_bytes), generation aware.
    cap = _vmem_capacity_bytes()
    if cap >= (100 << 20):       # v5e / v6e: 128 MiB VMEM
        return 28 << 20, 96 << 20
    return 12 << 20, 48 << 20    # v7x: 64 MiB VMEM


def _pick_row_tile(ho, per_row_bytes, budget, max_rows=None):
    cap = max(1, budget // max(per_row_bytes, 1))
    if max_rows is not None:
        cap = min(cap, max_rows)
    if cap >= ho:
        return ho, 1             # whole image per grid step (small images)
    th = max(8, (cap // 8) * 8)  # multiple of 8 keeps th*Wo sublane aligned
    nt = -(-ho // th)
    return th, nt


# ----------------------------------------------------------------------------
# Pallas wrappers
# ----------------------------------------------------------------------------

def _downsample_conv(x_nhwc, w, b, max_rows_per_step=None):
    # x_nhwc: (N, H, W, Cin) f32; w: (3, 3, Cin, Cout) HWIO; b: (Cout,)
    n, h, wd, cin = x_nhwc.shape
    cout = w.shape[-1]
    ho = (h - 2) // 2 + 1                 # floor((H + 1 - 3) / 2) + 1
    wo = (wd - 2) // 2 + 1
    wp2 = _round_up(wo + 1, 8)            # paired width, sublane aligned

    budget, vmem_limit = _budgets()
    per_row = 2 * (2 * wp2 * 2 * cin * 2 + wo * cout * 4)   # double-buffered
    th, nt = _pick_row_tile(ho, per_row, budget, max_rows_per_step)
    hop = nt * th                          # padded output rows (extra rows dropped)
    hp = 2 * hop + 1                       # padded input rows

    # Zero pad (bottom/right) + pair adjacent columns into lanes.  The final
    # reshape is a free row-major bitcast; pad/cast fuse with the caller's
    # NCHW->NHWC transpose into one XLA pass.
    xp = jnp.pad(x_nhwc, ((0, 0), (0, hp - h), (0, 2 * wp2 - wd), (0, 0)))
    xp = xp.reshape(n, hp, wp2, 2 * cin).astype(jnp.bfloat16)

    w01 = jnp.concatenate([w[:, 0], w[:, 1]], axis=1).astype(jnp.bfloat16)  # (3,2Cin,Cout)
    w2 = w[:, 2].astype(jnp.bfloat16)                                       # (3,Cin,Cout)
    b2 = b.reshape(1, cout).astype(jnp.float32)

    cost = pl.CostEstimate(
        flops=2 * n * ho * wo * 9 * cin * cout,
        transcendentals=0,
        bytes_accessed=int(xp.size) * 2 + 9 * cin * cout * 2 + cout * 4
                       + n * hop * wo * cout * 4)

    out = pl.pallas_call(
        _downsample_conv_kernel,
        out_shape=jax.ShapeDtypeStruct((n, hop * wo, cout), jnp.float32),
        grid=(n, nt),
        in_specs=[
            # main rows of the tile (non-overlapping blocks)
            pl.BlockSpec((None, 2 * th, wp2, 2 * cin),
                         lambda bi, ti: (bi, ti, 0, 0)),
            # 1-row halo, same array, element row 2*th*(ti+1) (block size 1)
            pl.BlockSpec((None, 1, wp2, 2 * cin),
                         lambda bi, ti: (bi, 2 * th * (ti + 1), 0, 0)),
            pl.BlockSpec((3, 2 * cin, cout), lambda bi, ti: (0, 0, 0)),
            pl.BlockSpec((3, cin, cout), lambda bi, ti: (0, 0, 0)),
            pl.BlockSpec((1, cout), lambda bi, ti: (0, 0)),
        ],
        out_specs=pl.BlockSpec((None, th * wo, cout), lambda bi, ti: (bi, ti, 0)),
        compiler_params=pltpu.CompilerParams(
            dimension_semantics=("parallel", "parallel"),
            vmem_limit_bytes=int(vmem_limit)),
        cost_estimate=cost,
    )(xp, xp, w01, w2, b2)

    return out[:, :ho * wo, :].reshape(n, ho, wo, cout)


def _avg_pool2x2(x_nhwc, max_rows_per_step=None):
    # x_nhwc: (N, H, W, C) f32 -> (N, H//2, W//2, C). Matches F.avg_pool2d(2, 2).
    n, h, wd, c = x_nhwc.shape
    ho, wo = h // 2, wd // 2

    budget, vmem_limit = _budgets()
    per_row = 2 * (2 * wo * 2 * c * 4 + wo * c * 4)
    th, nt = _pick_row_tile(ho, per_row, budget, max_rows_per_step)
    hop = nt * th

    xs = x_nhwc[:, :2 * ho, :2 * wo, :]
    if hop > ho:
        xs = jnp.pad(xs, ((0, 0), (0, 2 * (hop - ho)), (0, 0), (0, 0)))
    xp = xs.reshape(n, 2 * hop, wo, 2 * c)          # free column-pair reshape

    cost = pl.CostEstimate(
        flops=4 * n * ho * wo * c, transcendentals=0,
        bytes_accessed=int(xp.size) * 4 + n * hop * wo * c * 4)

    out = pl.pallas_call(
        _avg_pool2x2_kernel,
        out_shape=jax.ShapeDtypeStruct((n, hop * wo, c), jnp.float32),
        grid=(n, nt),
        in_specs=[pl.BlockSpec((None, 2 * th, wo, 2 * c),
                               lambda bi, ti: (bi, ti, 0, 0))],
        out_specs=pl.BlockSpec((None, th * wo, c), lambda bi, ti: (bi, ti, 0)),
        compiler_params=pltpu.CompilerParams(
            dimension_semantics=("parallel", "parallel"),
            vmem_limit_bytes=int(vmem_limit)),
        cost_estimate=cost,
    )(xp)

    return out[:, :ho * wo, :].reshape(n, ho, wo, c)


# ----------------------------------------------------------------------------
# Downsample forward (NCHW external, NHWC internal)
# ----------------------------------------------------------------------------

def downsample_forward(x_nchw, params=None, *, with_conv=True, max_rows_per_step=None):
    x = jnp.transpose(x_nchw, (0, 2, 3, 1)).astype(jnp.float32)
    if with_conv:
        y = _downsample_conv(x, params["w"], params["b"], max_rows_per_step)
    else:
        y = _avg_pool2x2(x, max_rows_per_step)
    return jnp.transpose(y, (0, 3, 1, 2))


def init_params(key, in_channel):
    kw, kb = jax.random.split(key)
    w = (1.0 / (3.0 * float(in_channel) ** 0.5)) * jax.random.normal(
        kw, (3, 3, in_channel, in_channel), jnp.float32)   # HWIO
    b = 0.01 * jax.random.normal(kb, (in_channel,), jnp.float32)
    return {"w": w, "b": b}


# ----------------------------------------------------------------------------

if __name__ == "__main__":
    key = jax.random.PRNGKey(0)
    kx, kp, kx2 = jax.random.split(key, 3)

    # Downsample(in_channel=128); C=128 keeps channels lane-dense on TPU.
    N, C, H, W = 2, 128, 16, 16
    x = jax.random.normal(kx, (N, C, H, W), jnp.float32)    # NCHW
    params = init_params(kp, C)

    def conv_ref(x_nchw):
        # Reference with the same bf16-rounded operands, f32 accumulation.
        x_nhwc = jnp.transpose(x_nchw, (0, 2, 3, 1))
        xb = x_nhwc.astype(jnp.bfloat16).astype(jnp.float32)
        wb = params["w"].astype(jnp.bfloat16).astype(jnp.float32)
        r = jax.lax.conv_general_dilated(
            xb, wb, window_strides=(2, 2), padding=((0, 1), (0, 1)),
            dimension_numbers=("NHWC", "HWIO", "NHWC"),
            precision=jax.lax.Precision.HIGHEST) + params["b"][None, None, None, :]
        return jnp.transpose(r, (0, 3, 1, 2))

    def pool_ref(x_nchw):
        n_, c_, h_, w_ = x_nchw.shape
        return x_nchw.reshape(n_, c_, h_ // 2, 2, w_ // 2, 2).mean(axis=(3, 5))

    # --- with_conv=True, single grid step per image ---
    out = jax.block_until_ready(downsample_forward(x, params, with_conv=True))
    assert out.shape == (N, C, H // 2, W // 2), out.shape
    ref = conv_ref(x)
    assert bool(jnp.allclose(out, ref, rtol=3e-2, atol=3e-2)), \
        float(jnp.max(jnp.abs(out - ref)))

    # --- with_conv=False (avg_pool2d 2x2 stride 2) ---
    out_pool = jax.block_until_ready(downsample_forward(x, with_conv=False))
    assert out_pool.shape == (N, C, H // 2, W // 2), out_pool.shape
    assert bool(jnp.allclose(out_pool, pool_ref(x), rtol=1e-4, atol=1e-4))

    # --- row-tiled path (forced th=8 -> 2 row tiles per image) ---
    H2 = W2 = 32
    x2 = jax.random.normal(kx2, (N, C, H2, W2), jnp.float32)
    out2 = jax.block_until_ready(
        downsample_forward(x2, params, with_conv=True, max_rows_per_step=8))
    ref2 = conv_ref(x2)
    assert out2.shape == (N, C, H2 // 2, W2 // 2), out2.shape
    assert bool(jnp.allclose(out2, ref2, rtol=3e-2, atol=3e-2)), \
        float(jnp.max(jnp.abs(out2 - ref2)))

    out2p = jax.block_until_ready(
        downsample_forward(x2, with_conv=False, max_rows_per_step=8))
    assert bool(jnp.allclose(out2p, pool_ref(x2), rtol=1e-4, atol=1e-4))

    print("KERNEL_OK")
</pallas_src>

<mosaic_0001>
module attributes {stable_mosaic.version = 11 : i64} {
  func.func @_downsample_conv_kernel(%arg0: i32, %arg1: i32, %arg2: memref<1x16x16x256xbf16, #tpu.memory_space<vmem>>, %arg3: memref<1x1x16x256xbf16, #tpu.memory_space<vmem>>, %arg4: memref<3x256x128xbf16, #tpu.memory_space<vmem>>, %arg5: memref<3x128x128xbf16, #tpu.memory_space<vmem>>, %arg6: memref<1x128xf32, #tpu.memory_space<vmem>>, %arg7: memref<1x64x128xf32, #tpu.memory_space<vmem>>) attributes {dimension_semantics = [#tpu.dimension_semantics<parallel>, #tpu.dimension_semantics<parallel>], iteration_bounds = array<i64: 2, 1>, scalar_prefetch = 0 : i64, scratch_operands = 0 : i64, tpu.core_type = #tpu.core_type<tc>, window_params = [{transform_indices = @transform_0, window_bounds = array<i64: 1, 16, 16, 256>}, {transform_indices = @transform_1, window_bounds = array<i64: 1, 1, 16, 256>}, {pipeline_mode = #tpu.pipeline_mode<synchronous>, transform_indices = @transform_2, window_bounds = array<i64: 3, 256, 128>}, {pipeline_mode = #tpu.pipeline_mode<synchronous>, transform_indices = @transform_3, window_bounds = array<i64: 3, 128, 128>}, {pipeline_mode = #tpu.pipeline_mode<synchronous>, transform_indices = @transform_4, window_bounds = array<i64: 1, 128>}, {transform_indices = @transform_5, window_bounds = array<i64: 1, 64, 128>}]} {
    %c0 = arith.constant 0 : index
    %c0_0 = arith.constant 0 : index
    %c0_1 = arith.constant 0 : index
    %c0_2 = arith.constant 0 : index
    %0 = vector.load %arg2[%c0, %c0_0, %c0_1, %c0_2] : memref<1x16x16x256xbf16, #tpu.memory_space<vmem>>, vector<1x16x16x256xbf16>
    %1 = vector.shape_cast %0 : vector<1x16x16x256xbf16> to vector<16x16x256xbf16>
    %2 = vector.shape_cast %1 : vector<16x16x256xbf16> to vector<8x2x16x256xbf16>
    %3 = vector.extract_strided_slice %2 {offsets = [0, 0, 0, 0], sizes = [8, 1, 16, 256], strides = [1, 1, 1, 1]} : vector<8x2x16x256xbf16> to vector<8x1x16x256xbf16>
    %4 = vector.shape_cast %3 : vector<8x1x16x256xbf16> to vector<8x16x256xbf16>
    %5 = vector.extract_strided_slice %2 {offsets = [0, 1, 0, 0], sizes = [8, 1, 16, 256], strides = [1, 1, 1, 1]} : vector<8x2x16x256xbf16> to vector<8x1x16x256xbf16>
    %6 = vector.shape_cast %5 : vector<8x1x16x256xbf16> to vector<8x16x256xbf16>
    %7 = vector.extract_strided_slice %2 {offsets = [1, 0, 0, 0], sizes = [7, 1, 16, 256], strides = [1, 1, 1, 1]} : vector<8x2x16x256xbf16> to vector<7x1x16x256xbf16>
    %8 = vector.shape_cast %7 : vector<7x1x16x256xbf16> to vector<7x16x256xbf16>
    %c0_3 = arith.constant 0 : index
    %c0_4 = arith.constant 0 : index
    %c0_5 = arith.constant 0 : index
    %c0_6 = arith.constant 0 : index
    %9 = vector.load %arg3[%c0_3, %c0_4, %c0_5, %c0_6] : memref<1x1x16x256xbf16, #tpu.memory_space<vmem>>, vector<1x1x16x256xbf16>
    %10 = vector.shape_cast %9 : vector<1x1x16x256xbf16> to vector<1x16x256xbf16>
    %11 = tpu.concatenate %8, %10 in 0 : vector<7x16x256xbf16>, vector<1x16x256xbf16> -> vector<8x16x256xbf16>
    %cst = arith.constant 0.000000e+00 : f32
    %12 = vector.broadcast %cst : f32 to vector<64x128xf32>
    %13 = vector.extract_strided_slice %4 {offsets = [0, 0, 0], sizes = [8, 8, 256], strides = [1, 1, 1]} : vector<8x16x256xbf16> to vector<8x8x256xbf16>
    %14 = vector.shape_cast %13 : vector<8x8x256xbf16> to vector<64x256xbf16>
    %c0_7 = arith.constant 0 : index
    %c0_8 = arith.constant 0 : index
    %c0_9 = arith.constant 0 : index
    %15 = vector.load %arg4[%c0_7, %c0_8, %c0_9] : memref<3x256x128xbf16, #tpu.memory_space<vmem>>, vector<1x256x128xbf16>
    %16 = vector.shape_cast %15 : vector<1x256x128xbf16> to vector<256x128xbf16>
    %cst_10 = arith.constant dense<0.000000e+00> : vector<64x128xf32>
    %17 = tpu.matmul %14, %16, %cst_10 {dimension_numbers = #tpu.dot_dimension_numbers<[1], [0], [0], [1], [0, 0, 1, 1], [], []>} : vector<64x256xbf16>, vector<256x128xbf16>, vector<64x128xf32> -> vector<64x128xf32>
    %18 = arith.addf %12, %17 : vector<64x128xf32>
    %19 = vector.extract_strided_slice %4 {offsets = [0, 1, 0], sizes = [8, 8, 128], strides = [1, 1, 1]} : vector<8x16x256xbf16> to vector<8x8x128xbf16>
    %20 = vector.shape_cast %19 : vector<8x8x128xbf16> to vector<64x128xbf16>
    %c0_11 = arith.constant 0 : index
    %c0_12 = arith.constant 0 : index
    %c0_13 = arith.constant 0 : index
    %21 = vector.load %arg5[%c0_11, %c0_12, %c0_13] : memref<3x128x128xbf16, #tpu.memory_space<vmem>>, vector<1x128x128xbf16>
    %22 = vector.shape_cast %21 : vector<1x128x128xbf16> to vector<128x128xbf16>
    %cst_14 = arith.constant dense<0.000000e+00> : vector<64x128xf32>
    %23 = tpu.matmul %20, %22, %cst_14 {dimension_numbers = #tpu.dot_dimension_numbers<[1], [0], [0], [1], [0, 0, 1, 1], [], []>} : vector<64x128xbf16>, vector<128x128xbf16>, vector<64x128xf32> -> vector<64x128xf32>
    %24 = arith.addf %18, %23 : vector<64x128xf32>
    %25 = vector.extract_strided_slice %6 {offsets = [0, 0, 0], sizes = [8, 8, 256], strides = [1, 1, 1]} : vector<8x16x256xbf16> to vector<8x8x256xbf16>
    %26 = vector.shape_cast %25 : vector<8x8x256xbf16> to vector<64x256xbf16>
    %c1 = arith.constant 1 : index
    %c0_15 = arith.constant 0 : index
    %c0_16 = arith.constant 0 : index
    %27 = vector.load %arg4[%c1, %c0_15, %c0_16] : memref<3x256x128xbf16, #tpu.memory_space<vmem>>, vector<1x256x128xbf16>
    %28 = vector.shape_cast %27 : vector<1x256x128xbf16> to vector<256x128xbf16>
    %cst_17 = arith.constant dense<0.000000e+00> : vector<64x128xf32>
    %29 = tpu.matmul %26, %28, %cst_17 {dimension_numbers = #tpu.dot_dimension_numbers<[1], [0], [0], [1], [0, 0, 1, 1], [], []>} : vector<64x256xbf16>, vector<256x128xbf16>, vector<64x128xf32> -> vector<64x128xf32>
    %30 = arith.addf %24, %29 : vector<64x128xf32>
    %31 = vector.extract_strided_slice %6 {offsets = [0, 1, 0], sizes = [8, 8, 128], strides = [1, 1, 1]} : vector<8x16x256xbf16> to vector<8x8x128xbf16>
    %32 = vector.shape_cast %31 : vector<8x8x128xbf16> to vector<64x128xbf16>
    %c1_18 = arith.constant 1 : index
    %c0_19 = arith.constant 0 : index
    %c0_20 = arith.constant 0 : index
    %33 = vector.load %arg5[%c1_18, %c0_19, %c0_20] : memref<3x128x128xbf16, #tpu.memory_space<vmem>>, vector<1x128x128xbf16>
    %34 = vector.shape_cast %33 : vector<1x128x128xbf16> to vector<128x128xbf16>
    %cst_21 = arith.constant dense<0.000000e+00> : vector<64x128xf32>
    %35 = tpu.matmul %32, %34, %cst_21 {dimension_numbers = #tpu.dot_dimension_numbers<[1], [0], [0], [1], [0, 0, 1, 1], [], []>} : vector<64x128xbf16>, vector<128x128xbf16>, vector<64x128xf32> -> vector<64x128xf32>
    %36 = arith.addf %30, %35 : vector<64x128xf32>
    %37 = vector.extract_strided_slice %11 {offsets = [0, 0, 0], sizes = [8, 8, 256], strides = [1, 1, 1]} : vector<8x16x256xbf16> to vector<8x8x256xbf16>
    %38 = vector.shape_cast %37 : vector<8x8x256xbf16> to vector<64x256xbf16>
    %c2 = arith.constant 2 : index
    %c0_22 = arith.constant 0 : index
    %c0_23 = arith.constant 0 : index
    %39 = vector.load %arg4[%c2, %c0_22, %c0_23] : memref<3x256x128xbf16, #tpu.memory_space<vmem>>, vector<1x256x128xbf16>
    %40 = vector.shape_cast %39 : vector<1x256x128xbf16> to vector<256x128xbf16>
    %cst_24 = arith.constant dense<0.000000e+00> : vector<64x128xf32>
    %41 = tpu.matmul %38, %40, %cst_24 {dimension_numbers = #tpu.dot_dimension_numbers<[1], [0], [0], [1], [0, 0, 1, 1], [], []>} : vector<64x256xbf16>, vector<256x128xbf16>, vector<64x128xf32> -> vector<64x128xf32>
    %42 = arith.addf %36, %41 : vector<64x128xf32>
    %43 = vector.extract_strided_slice %11 {offsets = [0, 1, 0], sizes = [8, 8, 128], strides = [1, 1, 1]} : vector<8x16x256xbf16> to vector<8x8x128xbf16>
    %44 = vector.shape_cast %43 : vector<8x8x128xbf16> to vector<64x128xbf16>
    %c2_25 = arith.constant 2 : index
    %c0_26 = arith.constant 0 : index
    %c0_27 = arith.constant 0 : index
    %45 = vector.load %arg5[%c2_25, %c0_26, %c0_27] : memref<3x128x128xbf16, #tpu.memory_space<vmem>>, vector<1x128x128xbf16>
    %46 = vector.shape_cast %45 : vector<1x128x128xbf16> to vector<128x128xbf16>
    %cst_28 = arith.constant dense<0.000000e+00> : vector<64x128xf32>
    %47 = tpu.matmul %44, %46, %cst_28 {dimension_numbers = #tpu.dot_dimension_numbers<[1], [0], [0], [1], [0, 0, 1, 1], [], []>} : vector<64x128xbf16>, vector<128x128xbf16>, vector<64x128xf32> -> vector<64x128xf32>
    %48 = arith.addf %42, %47 : vector<64x128xf32>
    %c0_29 = arith.constant 0 : index
    %c0_30 = arith.constant 0 : index
    %49 = vector.load %arg6[%c0_29, %c0_30] : memref<1x128xf32, #tpu.memory_space<vmem>>, vector<1x128xf32>
    %50 = vector.broadcast %49 : vector<1x128xf32> to vector<64x128xf32>
    %51 = arith.addf %48, %50 : vector<64x128xf32>
    %c0_31 = arith.constant 0 : index
    %c0_32 = arith.constant 0 : index
    %c0_33 = arith.constant 0 : index
    %52 = vector.load %arg7[%c0_31, %c0_32, %c0_33] : memref<1x64x128xf32, #tpu.memory_space<vmem>>, vector<1x64x128xf32>
    %53 = vector.shape_cast %52 : vector<1x64x128xf32> to vector<64x128xf32>
    %54 = vector.shape_cast %51 : vector<64x128xf32> to vector<1x64x128xf32>
    tpu.vector_store %arg7[%c0_31, %c0_32, %c0_33], %54 {strides = array<i32>} : memref<1x64x128xf32, #tpu.memory_space<vmem>>, vector<1x64x128xf32>,
    return
  }
  func.func @transform_0(%arg0: i32, %arg1: i32) -> (i32, i32, i32, i32) {
    %c0_i32 = arith.constant 0 : i32
    %c0_i32_0 = arith.constant 0 : i32
    %c0_i32_1 = arith.constant 0 : i32
    return %arg0, %arg1, %c0_i32, %c0_i32_0 : i32, i32, i32, i32
  }
  func.func @transform_1(%arg0: i32, %arg1: i32) -> (i32, i32, i32, i32) {
    %c1_i32 = arith.constant 1 : i32
    %0 = arith.addi %arg1, %c1_i32 : i32
    %c16_i32 = arith.constant 16 : i32
    %1 = arith.muli %c16_i32, %0 : i32
    %c0_i32 = arith.constant 0 : i32
    %c0_i32_0 = arith.constant 0 : i32
    %c0_i32_1 = arith.constant 0 : i32
    return %arg0, %1, %c0_i32, %c0_i32_0 : i32, i32, i32, i32
  }
  func.func @transform_2(%arg0: i32, %arg1: i32) -> (i32, i32, i32) {
    %c0_i32 = arith.constant 0 : i32
    %c0_i32_0 = arith.constant 0 : i32
    %c0_i32_1 = arith.constant 0 : i32
    %c0_i32_2 = arith.constant 0 : i32
    return %c0_i32, %c0_i32_0, %c0_i32_1 : i32, i32, i32
  }
  func.func @transform_3(%arg0: i32, %arg1: i32) -> (i32, i32, i32) {
    %c0_i32 = arith.constant 0 : i32
    %c0_i32_0 = arith.constant 0 : i32
    %c0_i32_1 = arith.constant 0 : i32
    %c0_i32_2 = arith.constant 0 : i32
    return %c0_i32, %c0_i32_0, %c0_i32_1 : i32, i32, i32
  }
  func.func @transform_4(%arg0: i32, %arg1: i32) -> (i32, i32) {
    %c0_i32 = arith.constant 0 : i32
    %c0_i32_0 = arith.constant 0 : i32
    %c0_i32_1 = arith.constant 0 : i32
    return %c0_i32, %c0_i32_0 : i32, i32
  }
  func.func @transform_5(%arg0: i32, %arg1: i32) -> (i32, i32, i32) {
    %c0_i32 = arith.constant 0 : i32
    %c0_i32_0 = arith.constant 0 : i32
    return %arg0, %arg1, %c0_i32 : i32, i32, i32
  }
}

</mosaic_0001>

<llo_original>
// kernel: tpu_custom_call.1
$region0: #{tpu_custom_call.1}
  #allocation0 [shape = 'u32[]', space=smem, size = 0x4, offset = 0x4, fixed_abs, tag = 'smem constant byte address 0x4 - core index']
  #allocation1 [shape = 'u32[144,128]{1,0:T(1,128)}', space=vmem, size = 0x12000, scoped, tag = 'internal scratch']
  %s0 = inlined_call_operand.hbm [shape: bf16[2,17,16,256], index: 0, kind: input, shape index: {}]
  %s1 = inlined_call_operand.hbm [shape: bf16[2,17,16,256], index: 1, kind: input, shape index: {}]
  %s2 = inlined_call_operand.hbm [shape: bf16[3,256,128], index: 2, kind: input, shape index: {}]
  %s3 = inlined_call_operand.hbm [shape: bf16[3,128,128], index: 3, kind: input, shape index: {}]
  %s4 = inlined_call_operand.vmem [shape: f32[1,128], index: 4, kind: input, shape index: {}]
  %s5 = inlined_call_operand.hbm [shape: f32[2,64,128], index: 5, kind: output, shape index: {}]
  %s6 = sld [smem:[#allocation0]]
  $region69: #{tpu_custom_call.1} parent=0
    _
  %s8 = ssub.s32 1, %s6
  %s9 = scalar_select 0, %s8, %s6
  $region1: #{tpu_custom_call.1} parent=0
    #allocation2 [shape = 'u8[262144]{0}', space=vmem, size = 0x40000, scoped, tag = 'input window, operand 0']
    #allocation3 [shape = 's32[2]{0}', space=sflag, size = 0x8, scoped, tag = 'scoped memory for tpu_custom_call.1']
    #allocation4 [shape = 's32[2]{0}', space=sflag, size = 0x8, scoped, tag = 'scoped memory for tpu_custom_call.1']
    #allocation5 [shape = 'u8[16384]{0}', space=vmem, size = 0x4000, scoped, tag = 'input window, operand 1']
    #allocation6 [shape = 's32[2]{0}', space=sflag, size = 0x8, scoped, tag = 'scoped memory for tpu_custom_call.1']
    #allocation7 [shape = 'u8[196608]{0}', space=vmem, size = 0x30000, scoped, tag = 'input window, operand 2, single buffered']
    #allocation8 [shape = 'u8[98304]{0}', space=vmem, size = 0x18000, scoped, tag = 'input window, operand 3, single buffered']
    #allocation9 [shape = 's32[1]{0}', space=sflag, size = 0x4, scoped, tag = 'scoped memory for tpu_custom_call.1']
    #allocation10 [shape = 'u8[65536]{0}', space=vmem, size = 0x10000, scoped, tag = 'output window, operand 0']
    %10 = vsyncpa [#allocation3], 0
    %s11 = scalar_lea.sflag [#allocation3], 1
    %12 = vsyncpa %s11, 0
    %13 = vsyncpa [#allocation6], 0
    %s14 = scalar_lea.sflag [#allocation6], 1
    %15 = vsyncpa %s14, 0
    %16 = vsyncpa [#allocation9], 0
    %17 = vsyncpa [#allocation4], 0
    %s18 = scalar_lea.sflag [#allocation4], 1
    %19 = vsyncpa %s18, 0
    loop: start=0, step=1, limit=4
    $region2: #{tpu_custom_call.1} parent=1 // loop_pre_header
      _
    $region3: #{tpu_custom_call.1} parent=1 // loop_header
      %s21 = sphi 0, %s25
      %p22 = scmp.ge.s32.totalorder %s21, 4
      %s28 = sphi 0, %s40
      %s29 = sphi 0, %s36
      %s30 = sphi 0, %s28
      %s31 = sphi 0, %s29
      %s32 = sphi 0, %s30
      %s33 = sphi 0, %s31
      %s45 = sphi 0, %s47
      %s48 = sphi 0, %s45
      %s49 = sphi 0, %s48
      %s65 = sphi 0, %s49
      %s77 = sphi 0, %s79
      %s80 = sphi 0, %s77
      %s81 = sphi 0, %s80
      %s97 = sphi 0, %s81
      %s101 = sphi 0, %s101
      %s103 = sphi 0, %s101
      %s104 = sphi 0, %s103
      %s118 = sphi 0, %s104
      %s122 = sphi 0, %s122
      %s124 = sphi 0, %s122
      %s125 = sphi 0, %s124
      %s139 = sphi 0, %s125
      %s143 = sphi 0, %s143
      %s145 = sphi 0, %s143
      %s146 = sphi 0, %s145
      %s160 = sphi 0, %s146
      %s168 = sphi 0, %s170
      %s171 = sphi 0, %s168
      %s172 = sphi 0, %s171
      %s188 = sphi 0, %s172
    $region4: #{tpu_custom_call.1} parent=1 // loop_header_branch
      %24 = sbr.rel (%p22) target = $region8
    $region5: #{tpu_custom_call.1} parent=1 // loop_body
      %s26 = ssub.s32 %s21, 1
      %s27 = ssub.s32 %s21, 2
      %s34 = sadd.s32 1, %s29
      %p35 = scmp.ge.s32.totalorder %s34, 1
      %s36 = scalar_select %p35, 0, %s34
      %s37 = sadd.s32 1, %s28
      %s38 = scalar_select %p35, %s37, %s28
      %p39 = scmp.ge.s32.totalorder %s38, 2
      %s40 = scalar_select %p39, 0, %s38
      %s41 = ssub.s32 %s28, %s40
      %s42 = ssub.s32 %s29, %s36
      %s43 = sor.u32 %s41, %s42
      %p44 = scmp.eq.s32.totalorder %s43, 0
      %s46 = sadd.s32 %s45, 1
      %s47 = scalar_select %p44, %s45, %s46
      %p50 = pneg %p44
      %p51 = scmp.eq.s32.totalorder %s21, 1
      %p52 = por %p50, %p51
      %p53 = scmp.ne.s32.totalorder %s45, %s48
      %p54 = scmp.eq.s32.totalorder %s21, 0
      %p55 = por %p53, %p54
      %p56 = scmp.ne.s32.totalorder %s45, %s48
      %p57 = scmp.eq.s32.totalorder %s26, 1
      %p58 = por %p56, %p57
      %p59 = scmp.ne.s32.totalorder %s48, %s49
      %p60 = scmp.eq.s32.totalorder %s26, 0
      %p61 = por %p59, %p60
      %p62 = scmp.ne.s32.totalorder %s48, %s49
      %p63 = scmp.eq.s32.totalorder %s27, 1
      %p64 = por %p62, %p63
      %p66 = scmp.ne.s32.totalorder %s49, %s65
      %p67 = scmp.eq.s32.totalorder %s27, 0
      %p68 = por %p66, %p67
      %s69 = sadd.s32 %s29, 1
      %s70 = smul.u32 %s69, 16
      %s71 = sadd.s32 %s36, 1
      %s72 = smul.u32 %s71, 16
      %s73 = ssub.s32 %s28, %s40
      %s74 = ssub.s32 %s70, %s72
      %s75 = sor.u32 %s73, %s74
      %p76 = scmp.eq.s32.totalorder %s75, 0
      %s78 = sadd.s32 %s77, 1
      %s79 = scalar_select %p76, %s77, %s78
      %p82 = pneg %p76
      %p83 = scmp.eq.s32.totalorder %s21, 1
      %p84 = por %p82, %p83
      %p85 = scmp.ne.s32.totalorder %s77, %s80
      %p86 = scmp.eq.s32.totalorder %s21, 0
      %p87 = por %p85, %p86
      %p88 = scmp.ne.s32.totalorder %s77, %s80
      %p89 = scmp.eq.s32.totalorder %s26, 1
      %p90 = por %p88, %p89
      %p91 = scmp.ne.s32.totalorder %s80, %s81
      %p92 = scmp.eq.s32.totalorder %s26, 0
      %p93 = por %p91, %p92
      %p94 = scmp.ne.s32.totalorder %s80, %s81
      %p95 = scmp.eq.s32.totalorder %s27, 1
      %p96 = por %p94, %p95
      %p98 = scmp.ne.s32.totalorder %s81, %s97
      %p99 = scmp.eq.s32.totalorder %s27, 0
      %p100 = por %p98, %p99
      %s102 = sadd.s32 %s101, 1
      %p105 = scmp.eq.s32.totalorder %s21, 1
      %p106 = scmp.ne.s32.totalorder %s101, %s103
      %p107 = scmp.eq.s32.totalorder %s21, 0
      %p108 = por %p106, %p107
      %p109 = scmp.ne.s32.totalorder %s101, %s103
      %p110 = scmp.eq.s32.totalorder %s26, 1
      %p111 = por %p109, %p110
      %p112 = scmp.ne.s32.totalorder %s103, %s104
      %p113 = scmp.eq.s32.totalorder %s26, 0
      %p114 = por %p112, %p113
      %p115 = scmp.ne.s32.totalorder %s103, %s104
      %p116 = scmp.eq.s32.totalorder %s27, 1
      %p117 = por %p115, %p116
      %p119 = scmp.ne.s32.totalorder %s104, %s118
      %p120 = scmp.eq.s32.totalorder %s27, 0
      %p121 = por %p119, %p120
      %s123 = sadd.s32 %s122, 1
      %p126 = scmp.eq.s32.totalorder %s21, 1
      %p127 = scmp.ne.s32.totalorder %s122, %s124
      %p128 = scmp.eq.s32.totalorder %s21, 0
      %p129 = por %p127, %p128
      %p130 = scmp.ne.s32.totalorder %s122, %s124
      %p131 = scmp.eq.s32.totalorder %s26, 1
      %p132 = por %p130, %p131
      %p133 = scmp.ne.s32.totalorder %s124, %s125
      %p134 = scmp.eq.s32.totalorder %s26, 0
      %p135 = por %p133, %p134
      %p136 = scmp.ne.s32.totalorder %s124, %s125
      %p137 = scmp.eq.s32.totalorder %s27, 1
      %p138 = por %p136, %p137
      %p140 = scmp.ne.s32.totalorder %s125, %s139
      %p141 = scmp.eq.s32.totalorder %s27, 0
      %p142 = por %p140, %p141
      %s144 = sadd.s32 %s143, 1
      %p147 = scmp.eq.s32.totalorder %s21, 1
      %p148 = scmp.ne.s32.totalorder %s143, %s145
      %p149 = scmp.eq.s32.totalorder %s21, 0
      %p150 = por %p148, %p149
      %p151 = scmp.ne.s32.totalorder %s143, %s145
      %p152 = scmp.eq.s32.totalorder %s26, 1
      %p153 = por %p151, %p152
      %p154 = scmp.ne.s32.totalorder %s145, %s146
      %p155 = scmp.eq.s32.totalorder %s26, 0
      %p156 = por %p154, %p155
      %p157 = scmp.ne.s32.totalorder %s145, %s146
      %p158 = scmp.eq.s32.totalorder %s27, 1
      %p159 = por %p157, %p158
      %p161 = scmp.ne.s32.totalorder %s146, %s160
      %p162 = scmp.eq.s32.totalorder %s27, 0
      %p163 = por %p161, %p162
      %s164 = ssub.s32 %s28, %s40
      %s165 = ssub.s32 %s29, %s36
      %s166 = sor.u32 %s164, %s165
      %p167 = scmp.eq.s32.totalorder %s166, 0
      %s169 = sadd.s32 %s168, 1
      %s170 = scalar_select %p167, %s168, %s169
      %p173 = pneg %p167
      %p174 = scmp.eq.s32.totalorder %s21, 1
      %p175 = por %p173, %p174
      %p176 = scmp.ne.s32.totalorder %s168, %s171
      %p177 = scmp.eq.s32.totalorder %s21, 0
      %p178 = por %p176, %p177
      %p179 = scmp.ne.s32.totalorder %s168, %s171
      %p180 = scmp.eq.s32.totalorder %s26, 1
      %p181 = por %p179, %p180
      %p182 = scmp.ne.s32.totalorder %s171, %s172
      %p183 = scmp.eq.s32.totalorder %s26, 0
      %p184 = por %p182, %p183
      %p185 = scmp.ne.s32.totalorder %s171, %s172
      %p186 = scmp.eq.s32.totalorder %s27, 1
      %p187 = por %p185, %p186
      %p189 = scmp.ne.s32.totalorder %s172, %s188
      %p190 = scmp.eq.s32.totalorder %s27, 0
      %p191 = por %p189, %p190
      %p192 = scmp.le.s32.totalorder 1, %s21
      %p193 = scmp.lt.s32.totalorder %s21, 3
      %p194 = pnand %p192, %p193
      %p195 = pneg %p194
      // Predicated region
      $region9: #{tpu_custom_call.1} parent=5 // pred_check
        _
      $region10: #{tpu_custom_call.1} parent=5 // pred_check_branch
        %197 = sbr.rel (%p194) target = $region12
      $region11: #{tpu_custom_call.1} parent=5 // pred_region
        %s198 = ssub.s32 %s21, 1
        // Predicated region
        $region13: #{tpu_custom_call.1} parent=11 // pred_check
          %p199 = pneg %p114
        $region14: #{tpu_custom_call.1} parent=11 // pred_check_branch
          %201 = sbr.rel (%p199) target = $region16
        $region15: #{tpu_custom_call.1} parent=11 // pred_region
          %s203 = ssub.s32 6144, 6144
          %204 = vsyncadd [#allocation6], %s203
          %s205 = sshll.u32 [#allocation7], 4
          %s206 = int_to_ptr.vmem [resolvable:$true] %s205
          %211 = dma.hbm_to_vmem [thread:$0]  %s2, 6144, %s206, [#allocation6], 64, 64, 4
        $region16: #{tpu_custom_call.1} parent=11 // pred_fallthru
          _
        // Predicated region
        $region17: #{tpu_custom_call.1} parent=11 // pred_check
          %p212 = pneg %p135
        $region18: #{tpu_custom_call.1} parent=11 // pred_check_branch
          %214 = sbr.rel (%p212) target = $region20
        $region19: #{tpu_custom_call.1} parent=11 // pred_region
          %s216 = ssub.s32 3072, 3072
          %217 = vsyncadd [#allocation9], %s216
          %s218 = sshll.u32 [#allocation8], 4
          %s219 = int_to_ptr.vmem [resolvable:$true] %s218
          %224 = dma.hbm_to_vmem [thread:$0]  %s3, 3072, %s219, [#allocation9], 64, 64, 4
        $region20: #{tpu_custom_call.1} parent=11 // pred_fallthru
          _
        // Predicated region
        $region21: #{tpu_custom_call.1} parent=11 // pred_check
          %p225 = pneg %p156
        $region22: #{tpu_custom_call.1} parent=11 // pred_check_branch
          %227 = sbr.rel (%p225) target = $region24
        $region23: #{tpu_custom_call.1} parent=11 // pred_region
          _
        $region24: #{tpu_custom_call.1} parent=11 // pred_fallthru
          _
      $region12: #{tpu_custom_call.1} parent=5 // pred_fallthru
        _
      %p228 = scmp.lt.s32.totalorder %s21, 2
      // Predicated region
      $region25: #{tpu_custom_call.1} parent=5 // pred_check
        %p229 = pneg %p228
      $region26: #{tpu_custom_call.1} parent=5 // pred_check_branch
        %231 = sbr.rel (%p229) target = $region28
      $region27: #{tpu_custom_call.1} parent=5 // pred_region
        // Predicated region
        $region29: #{tpu_custom_call.1} parent=27 // pred_check
          %p232 = pneg %p55
        $region30: #{tpu_custom_call.1} parent=27 // pred_check_branch
          %234 = sbr.rel (%p232) target = $region32
        $region31: #{tpu_custom_call.1} parent=27 // pred_region
          %s235 = sand.u32 %s45, 1
          %s236 = scalar_lea.sflag [#allocation3], %s235
          %s237 = sand.u32 %s45, 1
          %s238 = smul.addr %s237, 256
          %s239 = scalar_lea.vmem [#allocation2], %s238
          %s240 = smul.u32 16, %s29
          %s241 = ssub.s32 17, %s240
          %p242 = scmp.lt.s32.totalorder %s241, 16
          %s243 = scalar_select %p242, %s241, 16
          %s244 = smul.u32 64, %s243
          %s245 = smul.u32 %s244, 2
          %s246 = smul.u32 %s245, 2
          %s248 = ssub.s32 4096, %s246
          %249 = vsyncadd %s236, %s248
          %p250 = scmp.ne.s32.totalorder 0, %s246
          %s251 = smul.addr %s240, 4
          %s252 = smul.addr %s28, 68
          %s253 = sadd.s32 %s251, %s252
          %s254 = smul.addr %s253, 64
          %s255 = scalar_lea.hbm %s0, %s254
          %s256 = smul.u32 %s243, 2
          %s257 = smul.u32 8, %s256
          %s258 = sshll.u32 %s239, 4
          %s259 = int_to_ptr.vmem [resolvable:$true] %s258
          %s260 = sshll.u32 %s257, 4
          %264 = dma.hbm_to_vmem [thread:$0]  (%p250), %s255, %s260, %s259, %s236, 128, 128, 8
        $region32: #{tpu_custom_call.1} parent=27 // pred_fallthru
          _
        // Predicated region
        $region33: #{tpu_custom_call.1} parent=27 // pred_check
          %p265 = pneg %p87
        $region34: #{tpu_custom_call.1} parent=27 // pred_check_branch
          %267 = sbr.rel (%p265) target = $region36
        $region35: #{tpu_custom_call.1} parent=27 // pred_region
          %s268 = sand.u32 %s21, 1
          %s269 = scalar_lea.sflag [#allocation6], %s268
          %s270 = sand.u32 %s77, 1
          %s271 = smul.addr %s270, 16
          %s272 = scalar_lea.vmem [#allocation5], %s271
          %s273 = sadd.s32 %s29, 1
          %s274 = smul.u32 %s273, 16
          %s276 = ssub.s32 256, 256
          %277 = vsyncadd %s269, %s276
          %s278 = smul.addr %s274, 4
          %s279 = smul.addr %s28, 68
          %s280 = sadd.s32 %s278, %s279
          %s281 = smul.addr %s280, 64
          %s282 = scalar_lea.hbm %s1, %s281
          %s283 = sshll.u32 %s272, 4
          %s284 = int_to_ptr.vmem [resolvable:$true] %s283
          %289 = dma.hbm_to_vmem [thread:$0]  %s282, 256, %s284, %s269, 128, 128, 8
        $region36: #{tpu_custom_call.1} parent=27 // pred_fallthru
          _
      $region28: #{tpu_custom_call.1} parent=5 // pred_fallthru
        _
      %p290 = scmp.le.s32.totalorder 1, %s21
      %p291 = scmp.lt.s32.totalorder %s21, 3
      %p292 = pnand %p290, %p291
      %p293 = pneg %p292
      // Predicated region
      $region37: #{tpu_custom_call.1} parent=5 // pred_check
        _
      $region38: #{tpu_custom_call.1} parent=5 // pred_check_branch
        %295 = sbr.rel (%p292) target = $region40
      $region39: #{tpu_custom_call.1} parent=5 // pred_region
        %s296 = ssub.s32 %s21, 1
        %s297 = sand.u32 %s48, 1
        %s298 = scalar_lea.sflag [#allocation3], %s297
        %s299 = sand.u32 %s48, 1
        %s300 = smul.addr %s299, 256
        %s301 = scalar_lea.vmem [#allocation2], %s300
        // Predicated region
        $region41: #{tpu_custom_call.1} parent=39 // pred_check
          %p302 = pneg %p61
        $region42: #{tpu_custom_call.1} parent=39 // pred_check_branch
          %304 = sbr.rel (%p302) target = $region44
        $region43: #{tpu_custom_call.1} parent=39 // pred_region
          %305 = dma.done %s298, 4096
        $region44: #{tpu_custom_call.1} parent=39 // pred_fallthru
          _
        %s306 = sand.u32 %s26, 1
        %s307 = scalar_lea.sflag [#allocation6], %s306
        %s308 = sand.u32 %s80, 1
        %s309 = smul.addr %s308, 16
        %s310 = scalar_lea.vmem [#allocation5], %s309
        // Predicated region
        $region45: #{tpu_custom_call.1} parent=39 // pred_check
          %p311 = pneg %p93
        $region46: #{tpu_custom_call.1} parent=39 // pred_check_branch
          %313 = sbr.rel (%p311) target = $region48
        $region47: #{tpu_custom_call.1} parent=39 // pred_region
          %314 = dma.done %s307, 256
        $region48: #{tpu_custom_call.1} parent=39 // pred_fallthru
          _
        // Predicated region
        $region49: #{tpu_custom_call.1} parent=39 // pred_check
          %p315 = pneg %p114
        $region50: #{tpu_custom_call.1} parent=39 // pred_check_branch
          %317 = sbr.rel (%p315) target = $region52
        $region51: #{tpu_custom_call.1} parent=39 // pred_region
          %318 = dma.done [#allocation6], 6144
        $region52: #{tpu_custom_call.1} parent=39 // pred_fallthru
          _
        // Predicated region
        $region53: #{tpu_custom_call.1} parent=39 // pred_check
          %p319 = pneg %p135
        $region54: #{tpu_custom_call.1} parent=39 // pred_check_branch
          %321 = sbr.rel (%p319) target = $region56
        $region55: #{tpu_custom_call.1} parent=39 // pred_region
          %322 = dma.done [#allocation9], 3072
        $region56: #{tpu_custom_call.1} parent=39 // pred_fallthru
          _
        %s323 = sand.u32 %s48, 1
        %s324 = scalar_lea.sflag [#allocation3], %s323
        %s325 = sand.u32 %s48, 1
        %s326 = smul.addr %s325, 256
        %s327 = scalar_lea.vmem [#allocation2], %s326
        %p328 = pneg %p61
        %p329 = pneg %p58
        %s330 = sand.u32 %s26, 1
        %s331 = scalar_lea.sflag [#allocation6], %s330
        %s332 = sand.u32 %s80, 1
        %s333 = smul.addr %s332, 16
        %s334 = scalar_lea.vmem [#allocation5], %s333
        %p335 = pneg %p93
        %p336 = pneg %p90
        %p337 = pneg %p114
        %p338 = pneg %p111
        %p339 = pneg %p135
        %p340 = pneg %p132
        %p341 = pneg %p156
        %p342 = pneg %p153
        %p343 = pneg %p184
        %p344 = pneg %p181
        %s345 = sand.u32 %s171, 1
        %s346 = scalar_lea.sflag [#allocation4], %s345
        %s347 = sand.u32 %s171, 1
        %s348 = smul.addr %s347, 64
        %s349 = scalar_lea.vmem [#allocation10], %s348
        %s350 = smul.u32 16, %s31
        %s351 = ssub.s32 17, %s350
        %p352 = scmp.lt.s32.totalorder %s351, 16
        %s353 = scalar_select %p352, %s351, 16
        %s354 = smul.u32 64, %s353
        %s355 = smul.u32 %s354, 2
        %s356 = smul.u32 %s355, 2
        %s357 = sadd.s32 %s31, 1
        %s358 = smul.u32 %s357, 16
        %s359 = smul.u32 8, %s31
        %v361 = vld [vmem:[%s301] sm:$0xff]
        %v362 = vld [vmem:[%s301 + $0x8] sm:$0xff]
        %v363 = vld [vmem:[%s301 + $0x10] sm:$0xff]
        %v364 = vld [vmem:[%s301 + $0x18] sm:$0xff]
        %v365 = vld [vmem:[%s301 + $0x20] sm:$0xff]
        %v366 = vld [vmem:[%s301 + $0x28] sm:$0xff]
        %v367 = vld [vmem:[%s301 + $0x30] sm:$0xff]
        %v368 = vld [vmem:[%s301 + $0x38] sm:$0xff]
        %v369 = vld [vmem:[%s301 + $0x40] sm:$0xff]
        %v370 = vld [vmem:[%s301 + $0x48] sm:$0xff]
        %v371 = vld [vmem:[%s301 + $0x50] sm:$0xff]
        %v372 = vld [vmem:[%s301 + $0x58] sm:$0xff]
        %v373 = vld [vmem:[%s301 + $0x60] sm:$0xff]
        %v374 = vld [vmem:[%s301 + $0x68] sm:$0xff]
        %v375 = vld [vmem:[%s301 + $0x70] sm:$0xff]
        %v376 = vld [vmem:[%s301 + $0x78] sm:$0xff]
        %v377 = vld [vmem:[%s301 + $0x80] sm:$0xff]
        %v378 = vld [vmem:[%s301 + $0x88] sm:$0xff]
        %v379 = vld [vmem:[%s301 + $0x90] sm:$0xff]
        %v380 = vld [vmem:[%s301 + $0x98] sm:$0xff]
        %v381 = vld [vmem:[%s301 + $0xa0] sm:$0xff]
        %v382 = vld [vmem:[%s301 + $0xa8] sm:$0xff]
        %v383 = vld [vmem:[%s301 + $0xb0] sm:$0xff]
        %v384 = vld [vmem:[%s301 + $0xb8] sm:$0xff]
        %v385 = vld [vmem:[%s301 + $0xc0] sm:$0xff]
        %v386 = vld [vmem:[%s301 + $0xc8] sm:$0xff]
        %v387 = vld [vmem:[%s301 + $0xd0] sm:$0xff]
        %v388 = vld [vmem:[%s301 + $0xd8] sm:$0xff]
        %v389 = vld [vmem:[%s301 + $0xe0] sm:$0xff]
        %v390 = vld [vmem:[%s301 + $0xe8] sm:$0xff]
        %v391 = vld [vmem:[%s301 + $0xf0] sm:$0xff]
        %v392 = vld [vmem:[%s301 + $0xf8] sm:$0xff]
        %v393 = vld [vmem:[%s310] sm:$0xff]
        %v394 = vld [vmem:[%s310 + $0x8] sm:$0xff]
        %v395 = vld [vmem:[#allocation7] sm:$0xf]
        %v396 = vld [vmem:[#allocation7 + $0x4] sm:$0xf]
        %v397 = vld [vmem:[#allocation7 + $0x8] sm:$0xf]
        %v398 = vld [vmem:[#allocation7 + $0xc] sm:$0xf]
        %v399 = vld [vmem:[#allocation7 + $0x10] sm:$0xf]
        %v400 = vld [vmem:[#allocation7 + $0x14] sm:$0xf]
        %v401 = vld [vmem:[#allocation7 + $0x18] sm:$0xf]
        %v402 = vld [vmem:[#allocation7 + $0x1c] sm:$0xf]
        %v403 = vld [vmem:[#allocation7 + $0x20] sm:$0xf]
        %v404 = vld [vmem:[#allocation7 + $0x24] sm:$0xf]
        %v405 = vld [vmem:[#allocation7 + $0x28] sm:$0xf]
        %v406 = vld [vmem:[#allocation7 + $0x2c] sm:$0xf]
        %v407 = vld [vmem:[#allocation7 + $0x30] sm:$0xf]
        %v408 = vld [vmem:[#allocation7 + $0x34] sm:$0xf]
        %v409 = vld [vmem:[#allocation7 + $0x38] sm:$0xf]
        %v410 = vld [vmem:[#allocation7 + $0x3c] sm:$0xf]
        %v411 = vld [vmem:[#allocation7 + $0x40] sm:$0xf]
        %v412 = vld [vmem:[#allocation7 + $0x44] sm:$0xf]
        %v413 = vld [vmem:[#allocation7 + $0x48] sm:$0xf]
        %v414 = vld [vmem:[#allocation7 + $0x4c] sm:$0xf]
        %v415 = vld [vmem:[#allocation7 + $0x50] sm:$0xf]
        %v416 = vld [vmem:[#allocation7 + $0x54] sm:$0xf]
        %v417 = vld [vmem:[#allocation7 + $0x58] sm:$0xf]
        %v418 = vld [vmem:[#allocation7 + $0x5c] sm:$0xf]
        %v419 = vld [vmem:[#allocation7 + $0x60] sm:$0xf]
        %v420 = vld [vmem:[#allocation7 + $0x64] sm:$0xf]
        %v421 = vld [vmem:[#allocation7 + $0x68] sm:$0xf]
        %v422 = vld [vmem:[#allocation7 + $0x6c] sm:$0xf]
        %v423 = vld [vmem:[#allocation7 + $0x70] sm:$0xf]
        %v424 = vld [vmem:[#allocation7 + $0x74] sm:$0xf]
        %v425 = vld [vmem:[#allocation7 + $0x78] sm:$0xf]
        %v426 = vld [vmem:[#allocation7 + $0x7c] sm:$0xf]
        %vm427 = vsmask.f32 3328
        %vm428 = vsmask.f32 7440
        %vm429 = vmor %vm427, %vm428
        %v431 = vshrl.u32 %v361, 16
        %v433 = vrot.slane %v431, 4
        %v434 = vshll.u32 %v361, 16
        %v436 = vrot.slane %v434, 5
        %v437 = vor.u32 %v433, %v436
        %v438 = vrot.slane %v437, 4
        %v440 = vshll.u32 %v362, 16
        %v442 = vrot.slane %v440, 5
        %v443 = vsel %vm429, %v438, %v442
        %v445 = vshrl.u32 %v365, 16
        %v447 = vrot.slane %v445, 4
        %v448 = vshll.u32 %v365, 16
        %v450 = vrot.slane %v448, 5
        %v451 = vor.u32 %v447, %v450
        %v452 = vrot.slane %v451, 4
        %v454 = vshll.u32 %v366, 16
        %v456 = vrot.slane %v454, 5
        %v457 = vsel %vm429, %v452, %v456
        %v459 = vshrl.u32 %v369, 16
        %v461 = vrot.slane %v459, 4
        %v462 = vshll.u32 %v369, 16
        %v464 = vrot.slane %v462, 5
        %v465 = vor.u32 %v461, %v464
        %v466 = vrot.slane %v465, 4
        %v468 = vshll.u32 %v370, 16
        %v470 = vrot.slane %v468, 5
        %v471 = vsel %vm429, %v466, %v470
        %v473 = vshrl.u32 %v373, 16
        %v475 = vrot.slane %v473, 4
        %v476 = vshll.u32 %v373, 16
        %v478 = vrot.slane %v476, 5
        %v479 = vor.u32 %v475, %v478
        %v480 = vrot.slane %v479, 4
        %v482 = vshll.u32 %v374, 16
        %v484 = vrot.slane %v482, 5
        %v485 = vsel %vm429, %v480, %v484
        %v487 = vshrl.u32 %v377, 16
        %v489 = vrot.slane %v487, 4
        %v490 = vshll.u32 %v377, 16
        %v492 = vrot.slane %v490, 5
        %v493 = vor.u32 %v489, %v492
        %v494 = vrot.slane %v493, 4
        %v496 = vshll.u32 %v378, 16
        %v498 = vrot.slane %v496, 5
        %v499 = vsel %vm429, %v494, %v498
        %v501 = vshrl.u32 %v381, 16
        %v503 = vrot.slane %v501, 4
        %v504 = vshll.u32 %v381, 16
        %v506 = vrot.slane %v504, 5
        %v507 = vor.u32 %v503, %v506
        %v508 = vrot.slane %v507, 4
        %v510 = vshll.u32 %v382, 16
        %v512 = vrot.slane %v510, 5
        %v513 = vsel %vm429, %v508, %v512
        %v515 = vshrl.u32 %v385, 16
        %v517 = vrot.slane %v515, 4
        %v518 = vshll.u32 %v385, 16
        %v520 = vrot.slane %v518, 5
        %v521 = vor.u32 %v517, %v520
        %v522 = vrot.slane %v521, 4
        %v524 = vshll.u32 %v386, 16
        %v526 = vrot.slane %v524, 5
        %v527 = vsel %vm429, %v522, %v526
        %v529 = vshrl.u32 %v389, 16
        %v531 = vrot.slane %v529, 4
        %v532 = vshll.u32 %v389, 16
        %v534 = vrot.slane %v532, 5
        %v535 = vor.u32 %v531, %v534
        %v536 = vrot.slane %v535, 4
        %v538 = vshll.u32 %v390, 16
        %v540 = vrot.slane %v538, 5
        %v541 = vsel %vm429, %v536, %v540
        %v542 = vld [vmem:[#allocation8] sm:$0xf]
        %v543 = vld [vmem:[#allocation8 + $0x4] sm:$0xf]
        %v544 = vld [vmem:[#allocation8 + $0x8] sm:$0xf]
        %v545 = vld [vmem:[#allocation8 + $0xc] sm:$0xf]
        %v546 = vld [vmem:[#allocation8 + $0x10] sm:$0xf]
        %v547 = vld [vmem:[#allocation8 + $0x14] sm:$0xf]
        %v548 = vld [vmem:[#allocation8 + $0x18] sm:$0xf]
        %v549 = vld [vmem:[#allocation8 + $0x1c] sm:$0xf]
        %v550 = vld [vmem:[#allocation8 + $0x20] sm:$0xf]
        %v551 = vld [vmem:[#allocation8 + $0x24] sm:$0xf]
        %v552 = vld [vmem:[#allocation8 + $0x28] sm:$0xf]
        %v553 = vld [vmem:[#allocation8 + $0x2c] sm:$0xf]
        %v554 = vld [vmem:[#allocation8 + $0x30] sm:$0xf]
        %v555 = vld [vmem:[#allocation8 + $0x34] sm:$0xf]
        %v556 = vld [vmem:[#allocation8 + $0x38] sm:$0xf]
        %v557 = vld [vmem:[#allocation8 + $0x3c] sm:$0xf]
        %v558 = vunpack.c.l.b16 %v443
        %v559 = vunpack.c.l.b16 %v457
        %v560 = vunpack.c.l.b16 %v471
        %v561 = vunpack.c.l.b16 %v485
        %v562 = vunpack.c.l.b16 %v499
        %v563 = vunpack.c.l.b16 %v513
        %v564 = vunpack.c.l.b16 %v527
        %v565 = vunpack.c.l.b16 %v541
        %v566 = vpack.c.b16 %v559, %v558
        %v567 = vpack.c.b16 %v561, %v560
        %v568 = vpack.c.b16 %v563, %v562
        %v569 = vpack.c.b16 %v565, %v564
        %v590 = vunpack.c.l.b16 %v542
        %v591 = vunpack.c.l.b16 %v543
        %v592 = vunpack.c.l.b16 %v544
        %v593 = vunpack.c.l.b16 %v545
        %v594 = vunpack.c.l.b16 %v546
        %v595 = vunpack.c.l.b16 %v547
        %v596 = vunpack.c.l.b16 %v548
        %v597 = vunpack.c.l.b16 %v549
        %v598 = vunpack.c.l.b16 %v550
        %v599 = vunpack.c.l.b16 %v551
        %v600 = vunpack.c.l.b16 %v552
        %v601 = vunpack.c.l.b16 %v553
        %v602 = vunpack.c.l.b16 %v554
        %v603 = vunpack.c.l.b16 %v555
        %v604 = vunpack.c.l.b16 %v556
        %v605 = vunpack.c.l.b16 %v557
        %v606 = vpack.c.b16 %v591, %v590
        %v607 = vpack.c.b16 %v593, %v592
        %v608 = vpack.c.b16 %v595, %v594
        %v609 = vpack.c.b16 %v597, %v596
        %v610 = vpack.c.b16 %v599, %v598
        %v611 = vpack.c.b16 %v601, %v600
        %v612 = vpack.c.b16 %v603, %v602
        %v613 = vpack.c.b16 %v605, %v604
        %622 = vmatprep.subr.bf16.mxu0 0
        %623 = vmatpush1.bf16.msra.mxu0 %v613
        %624 = vmatprep.subr.bf16.mxu0 0
        %625 = vmatpush1.bf16.msra.mxu0 %v612
        %626 = vmatprep.subr.bf16.mxu0 0
        %627 = vmatpush1.bf16.msra.mxu0 %v611
        %628 = vmatprep.subr.bf16.mxu0 0
        %629 = vmatpush1.bf16.msra.mxu0 %v610
        %630 = vmatprep.subr.bf16.mxu0 0
        %631 = vmatpush1.bf16.msra.mxu0 %v609
        %632 = vmatprep.subr.bf16.mxu0 0
        %633 = vmatpush1.bf16.msra.mxu0 %v608
        %634 = vmatprep.subr.bf16.mxu0 0
        %635 = vmatpush1.bf16.msra.mxu0 %v607
        %636 = vmatprep.subr.bf16.mxu0 0
        %637 = vmatpush1.bf16.msra.mxu0 %v606
        %638 = vmatprep.subr.bf16.mxu0 0
        %639 = vmatpush2.bf16.msra.mxu0 0
        %640 = vmatprep.subr.bf16.mxu0 0
        %641 = vmatpush2.bf16.msra.mxu0 0
        %642 = vmatprep.subr.bf16.mxu0 0
        %643 = vmatpush2.bf16.msra.mxu0 0
        %644 = vmatprep.subr.bf16.mxu0 0
        %645 = vmatpush2.bf16.msra.mxu0 0
        %646 = vmatprep.subr.bf16.mxu0 0
        %647 = vmatpush2.bf16.msra.mxu0 0
        %648 = vmatprep.subr.bf16.mxu0 0
        %649 = vmatpush2.bf16.msra.mxu0 0
        %650 = vmatprep.subr.bf16.mxu0 0
        %651 = vmatpush2.bf16.msra.mxu0 0
        %652 = vmatprep.subr.bf16.mxu0 0
        %653 = vmatpush2.bf16.msra.mxu0 0
        %654 = vmatprep.mubr.bf16.mxu0 0
        %655 = vmatmul.mubr.bf16.gmra.mxu0 %v566
        %v656 = vpop.f32.mrf.mxu0
        %v657 = vadd.f32 0.0, %v656
        %v658 = vpop.f32.mrf.mxu0
        %v659 = vpop.f32.mrf.mxu0
        %v660 = vadd.f32 0.0, %v659
        %v661 = vpop.f32.mrf.mxu0
        %662 = vmatprep.mubr.bf16.mxu0 0
        %663 = vmatmul.mubr.bf16.gmra.mxu0 %v567
        %v664 = vpop.f32.mrf.mxu0
        %v665 = vadd.f32 0.0, %v664
        %v666 = vpop.f32.mrf.mxu0
        %v667 = vpop.f32.mrf.mxu0
        %v668 = vadd.f32 0.0, %v667
        %v669 = vpop.f32.mrf.mxu0
        %670 = vmatprep.mubr.bf16.mxu0 0
        %671 = vmatmul.mubr.bf16.gmra.mxu0 %v568
        %v672 = vpop.f32.mrf.mxu0
        %v673 = vadd.f32 0.0, %v672
        %v674 = vpop.f32.mrf.mxu0
        %v675 = vpop.f32.mrf.mxu0
        %v676 = vadd.f32 0.0, %v675
        %v677 = vpop.f32.mrf.mxu0
        %678 = vmatprep.mubr.bf16.mxu0 0
        %679 = vmatmul.mubr.bf16.gmra.mxu0 %v569
        %v680 = vpop.f32.mrf.mxu0
        %v681 = vadd.f32 0.0, %v680
        %v682 = vpop.f32.mrf.mxu0
        %v683 = vpop.f32.mrf.mxu0
        %v684 = vadd.f32 0.0, %v683
        %v685 = vpop.f32.mrf.mxu0
        %686 = vdwg.mxu0
        %v695 = vunpack.c.l.b16 %v361
        %v696 = vunpack.c.h.b16 %v361
        %v697 = vunpack.c.l.b16 %v365
        %v698 = vunpack.c.h.b16 %v365
        %v699 = vunpack.c.l.b16 %v369
        %v700 = vunpack.c.h.b16 %v369
        %v701 = vunpack.c.l.b16 %v373
        %v702 = vunpack.c.h.b16 %v373
        %v703 = vunpack.c.l.b16 %v377
        %v704 = vunpack.c.h.b16 %v377
        %v705 = vunpack.c.l.b16 %v381
        %v706 = vunpack.c.h.b16 %v381
        %v707 = vunpack.c.l.b16 %v385
        %v708 = vunpack.c.h.b16 %v385
        %v709 = vunpack.c.l.b16 %v389
        %v710 = vunpack.c.h.b16 %v389
        %v711 = vpack.c.b16 %v697, %v695
        %v712 = vpack.c.b16 %v698, %v696
        %v713 = vpack.c.b16 %v701, %v699
        %v714 = vpack.c.b16 %v702, %v700
        %v715 = vpack.c.b16 %v705, %v703
        %v716 = vpack.c.b16 %v706, %v704
        %v717 = vpack.c.b16 %v709, %v707
        %v718 = vpack.c.b16 %v710, %v708
        %v759 = vunpack.c.l.b16 %v395
        %v760 = vunpack.c.l.b16 %v396
        %v761 = vunpack.c.l.b16 %v397
        %v762 = vunpack.c.l.b16 %v398
        %v763 = vunpack.c.l.b16 %v399
        %v764 = vunpack.c.l.b16 %v400
        %v765 = vunpack.c.l.b16 %v401
        %v766 = vunpack.c.l.b16 %v402
        %v767 = vunpack.c.l.b16 %v403
        %v768 = vunpack.c.l.b16 %v404
        %v769 = vunpack.c.l.b16 %v405
        %v770 = vunpack.c.l.b16 %v406
        %v771 = vunpack.c.l.b16 %v407
        %v772 = vunpack.c.l.b16 %v408
        %v773 = vunpack.c.l.b16 %v409
        %v774 = vunpack.c.l.b16 %v410
        %v775 = vunpack.c.l.b16 %v411
        %v776 = vunpack.c.l.b16 %v412
        %v777 = vunpack.c.l.b16 %v413
        %v778 = vunpack.c.l.b16 %v414
        %v779 = vunpack.c.l.b16 %v415
        %v780 = vunpack.c.l.b16 %v416
        %v781 = vunpack.c.l.b16 %v417
        %v782 = vunpack.c.l.b16 %v418
        %v783 = vunpack.c.l.b16 %v419
        %v784 = vunpack.c.l.b16 %v420
        %v785 = vunpack.c.l.b16 %v421
        %v786 = vunpack.c.l.b16 %v422
        %v787 = vunpack.c.l.b16 %v423
        %v788 = vunpack.c.l.b16 %v424
        %v789 = vunpack.c.l.b16 %v425
        %v790 = vunpack.c.l.b16 %v426
        %v791 = vpack.c.b16 %v760, %v759
        %v792 = vpack.c.b16 %v762, %v761
        %v793 = vpack.c.b16 %v764, %v763
        %v794 = vpack.c.b16 %v766, %v765
        %v795 = vpack.c.b16 %v768, %v767
        %v796 = vpack.c.b16 %v770, %v769
        %v797 = vpack.c.b16 %v772, %v771
        %v798 = vpack.c.b16 %v774, %v773
        %v799 = vpack.c.b16 %v776, %v775
        %v800 = vpack.c.b16 %v778, %v777
        %v801 = vpack.c.b16 %v780, %v779
        %v802 = vpack.c.b16 %v782, %v781
        %v803 = vpack.c.b16 %v784, %v783
        %v804 = vpack.c.b16 %v786, %v785
        %v805 = vpack.c.b16 %v788, %v787
        %v806 = vpack.c.b16 %v790, %v789
        %823 = vmatprep.subr.bf16.mxu0 0
        %824 = vmatpush1.bf16.msra.mxu0 %v798
        %825 = vmatprep.subr.bf16.mxu0 0
        %826 = vmatpush1.bf16.msra.mxu0 %v797
        %827 = vmatprep.subr.bf16.mxu0 0
        %828 = vmatpush1.bf16.msra.mxu0 %v796
        %829 = vmatprep.subr.bf16.mxu0 0
        %830 = vmatpush1.bf16.msra.mxu0 %v795
        %831 = vmatprep.subr.bf16.mxu0 0
        %832 = vmatpush1.bf16.msra.mxu0 %v794
        %833 = vmatprep.subr.bf16.mxu0 0
        %834 = vmatpush1.bf16.msra.mxu0 %v793
        %835 = vmatprep.subr.bf16.mxu0 0
        %836 = vmatpush1.bf16.msra.mxu0 %v792
        %837 = vmatprep.subr.bf16.mxu0 0
        %838 = vmatpush1.bf16.msra.mxu0 %v791
        %839 = vmatprep.subr.bf16.mxu0 0
        %840 = vmatpush2.bf16.msra.mxu0 %v806
        %841 = vmatprep.subr.bf16.mxu0 0
        %842 = vmatpush2.bf16.msra.mxu0 %v805
        %843 = vmatprep.subr.bf16.mxu0 0
        %844 = vmatpush2.bf16.msra.mxu0 %v804
        %845 = vmatprep.subr.bf16.mxu0 0
        %846 = vmatpush2.bf16.msra.mxu0 %v803
        %847 = vmatprep.subr.bf16.mxu0 0
        %848 = vmatpush2.bf16.msra.mxu0 %v802
        %849 = vmatprep.subr.bf16.mxu0 0
        %850 = vmatpush2.bf16.msra.mxu0 %v801
        %851 = vmatprep.subr.bf16.mxu0 0
        %852 = vmatpush2.bf16.msra.mxu0 %v800
        %853 = vmatprep.subr.bf16.mxu0 0
        %854 = vmatpush2.bf16.msra.mxu0 %v799
        %855 = vmatprep.mubr.bf16.mxu0 %v712
        %856 = vmatmul.mubr.bf16.gmra.mxu0 %v711
        %v857 = vpop.f32.mrf.mxu0
        %v858 = vadd.f32 %v657, %v857
        %v859 = vpop.f32.mrf.mxu0
        %v860 = vpop.f32.mrf.mxu0
        %v861 = vadd.f32 %v660, %v860
        %v862 = vpop.f32.mrf.mxu0
        %863 = vmatprep.mubr.bf16.mxu0 %v714
        %864 = vmatmul.mubr.bf16.gmra.mxu0 %v713
        %v865 = vpop.f32.mrf.mxu0
        %v866 = vadd.f32 %v665, %v865
        %v867 = vpop.f32.mrf.mxu0
        %v868 = vpop.f32.mrf.mxu0
        %v869 = vadd.f32 %v668, %v868
        %v870 = vpop.f32.mrf.mxu0
        %871 = vmatprep.mubr.bf16.mxu0 %v716
        %872 = vmatmul.mubr.bf16.gmra.mxu0 %v715
        %v873 = vpop.f32.mrf.mxu0
        %v874 = vadd.f32 %v673, %v873
        %v875 = vpop.f32.mrf.mxu0
        %v876 = vpop.f32.mrf.mxu0
        %v877 = vadd.f32 %v676, %v876
        %v878 = vpop.f32.mrf.mxu0
        %879 = vmatprep.mubr.bf16.mxu0 %v718
        %880 = vmatmul.mubr.bf16.gmra.mxu0 %v717
        %v881 = vpop.f32.mrf.mxu0
        %v882 = vadd.f32 %v681, %v881
        %v883 = vpop.f32.mrf.mxu0
        %v884 = vpop.f32.mrf.mxu0
        %v885 = vadd.f32 %v684, %v884
        %v886 = vpop.f32.mrf.mxu0
        %887 = vdwg.mxu0
        %s888 = scalar_lea.vmem [#allocation7], 128
        %v889 = vld [vmem:[%s888] sm:$0xf]
        %v890 = vld [vmem:[%s888 + $0x4] sm:$0xf]
        %v891 = vld [vmem:[%s888 + $0x8] sm:$0xf]
        %v892 = vld [vmem:[%s888 + $0xc] sm:$0xf]
        %v893 = vld [vmem:[%s888 + $0x10] sm:$0xf]
        %v894 = vld [vmem:[%s888 + $0x14] sm:$0xf]
        %v895 = vld [vmem:[%s888 + $0x18] sm:$0xf]
        %v896 = vld [vmem:[%s888 + $0x1c] sm:$0xf]
        %v897 = vld [vmem:[%s888 + $0x20] sm:$0xf]
        %v898 = vld [vmem:[%s888 + $0x24] sm:$0xf]
        %v899 = vld [vmem:[%s888 + $0x28] sm:$0xf]
        %v900 = vld [vmem:[%s888 + $0x2c] sm:$0xf]
        %v901 = vld [vmem:[%s888 + $0x30] sm:$0xf]
        %v902 = vld [vmem:[%s888 + $0x34] sm:$0xf]
        %v903 = vld [vmem:[%s888 + $0x38] sm:$0xf]
        %v904 = vld [vmem:[%s888 + $0x3c] sm:$0xf]
        %v905 = vld [vmem:[%s888 + $0x40] sm:$0xf]
        %v906 = vld [vmem:[%s888 + $0x44] sm:$0xf]
        %v907 = vld [vmem:[%s888 + $0x48] sm:$0xf]
        %v908 = vld [vmem:[%s888 + $0x4c] sm:$0xf]
        %v909 = vld [vmem:[%s888 + $0x50] sm:$0xf]
        %v910 = vld [vmem:[%s888 + $0x54] sm:$0xf]
        %v911 = vld [vmem:[%s888 + $0x58] sm:$0xf]
        %v912 = vld [vmem:[%s888 + $0x5c] sm:$0xf]
        %v913 = vld [vmem:[%s888 + $0x60] sm:$0xf]
        %v914 = vld [vmem:[%s888 + $0x64] sm:$0xf]
        %v915 = vld [vmem:[%s888 + $0x68] sm:$0xf]
        %v916 = vld [vmem:[%s888 + $0x6c] sm:$0xf]
        %v917 = vld [vmem:[%s888 + $0x70] sm:$0xf]
        %v918 = vld [vmem:[%s888 + $0x74] sm:$0xf]
        %v919 = vld [vmem:[%s888 + $0x78] sm:$0xf]
        %v920 = vld [vmem:[%s888 + $0x7c] sm:$0xf]
        %v929 = vunpack.c.l.b16 %v363
        %v930 = vunpack.c.h.b16 %v363
        %v931 = vunpack.c.l.b16 %v367
        %v932 = vunpack.c.h.b16 %v367
        %v933 = vunpack.c.l.b16 %v371
        %v934 = vunpack.c.h.b16 %v371
        %v935 = vunpack.c.l.b16 %v375
        %v936 = vunpack.c.h.b16 %v375
        %v937 = vunpack.c.l.b16 %v379
        %v938 = vunpack.c.h.b16 %v379
        %v939 = vunpack.c.l.b16 %v383
        %v940 = vunpack.c.h.b16 %v383
        %v941 = vunpack.c.l.b16 %v387
        %v942 = vunpack.c.h.b16 %v387
        %v943 = vunpack.c.l.b16 %v391
        %v944 = vunpack.c.h.b16 %v391
        %v945 = vpack.c.b16 %v931, %v929
        %v946 = vpack.c.b16 %v932, %v930
        %v947 = vpack.c.b16 %v935, %v933
        %v948 = vpack.c.b16 %v936, %v934
        %v949 = vpack.c.b16 %v939, %v937
        %v950 = vpack.c.b16 %v940, %v938
        %v951 = vpack.c.b16 %v943, %v941
        %v952 = vpack.c.b16 %v944, %v942
        %v993 = vunpack.c.l.b16 %v889
        %v994 = vunpack.c.l.b16 %v890
        %v995 = vunpack.c.l.b16 %v891
        %v996 = vunpack.c.l.b16 %v892
        %v997 = vunpack.c.l.b16 %v893
        %v998 = vunpack.c.l.b16 %v894
        %v999 = vunpack.c.l.b16 %v895
        %v1000 = vunpack.c.l.b16 %v896
        %v1001 = vunpack.c.l.b16 %v897
        %v1002 = vunpack.c.l.b16 %v898
        %v1003 = vunpack.c.l.b16 %v899
        %v1004 = vunpack.c.l.b16 %v900
        %v1005 = vunpack.c.l.b16 %v901
        %v1006 = vunpack.c.l.b16 %v902
        %v1007 = vunpack.c.l.b16 %v903
        %v1008 = vunpack.c.l.b16 %v904
        %v1009 = vunpack.c.l.b16 %v905
        %v1010 = vunpack.c.l.b16 %v906
        %v1011 = vunpack.c.l.b16 %v907
        %v1012 = vunpack.c.l.b16 %v908
        %v1013 = vunpack.c.l.b16 %v909
        %v1014 = vunpack.c.l.b16 %v910
        %v1015 = vunpack.c.l.b16 %v911
        %v1016 = vunpack.c.l.b16 %v912
        %v1017 = vunpack.c.l.b16 %v913
        %v1018 = vunpack.c.l.b16 %v914
        %v1019 = vunpack.c.l.b16 %v915
        %v1020 = vunpack.c.l.b16 %v916
        %v1021 = vunpack.c.l.b16 %v917
        %v1022 = vunpack.c.l.b16 %v918
        %v1023 = vunpack.c.l.b16 %v919
        %v1024 = vunpack.c.l.b16 %v920
        %v1025 = vpack.c.b16 %v994, %v993
        %v1026 = vpack.c.b16 %v996, %v995
        %v1027 = vpack.c.b16 %v998, %v997
        %v1028 = vpack.c.b16 %v1000, %v999
        %v1029 = vpack.c.b16 %v1002, %v1001
        %v1030 = vpack.c.b16 %v1004, %v1003
        %v1031 = vpack.c.b16 %v1006, %v1005
        %v1032 = vpack.c.b16 %v1008, %v1007
        %v1033 = vpack.c.b16 %v1010, %v1009
        %v1034 = vpack.c.b16 %v1012, %v1011
        %v1035 = vpack.c.b16 %v1014, %v1013
        %v1036 = vpack.c.b16 %v1016, %v1015
        %v1037 = vpack.c.b16 %v1018, %v1017
        %v1038 = vpack.c.b16 %v1020, %v1019
        %v1039 = vpack.c.b16 %v1022, %v1021
        %v1040 = vpack.c.b16 %v1024, %v1023
        %1057 = vmatprep.subr.bf16.mxu0 0
        %1058 = vmatpush1.bf16.msra.mxu0 %v1032
        %1059 = vmatprep.subr.bf16.mxu0 0
        %1060 = vmatpush1.bf16.msra.mxu0 %v1031
        %1061 = vmatprep.subr.bf16.mxu0 0
        %1062 = vmatpush1.bf16.msra.mxu0 %v1030
        %1063 = vmatprep.subr.bf16.mxu0 0
        %1064 = vmatpush1.bf16.msra.mxu0 %v1029
        %1065 = vmatprep.subr.bf16.mxu0 0
        %1066 = vmatpush1.bf16.msra.mxu0 %v1028
        %1067 = vmatprep.subr.bf16.mxu0 0
        %1068 = vmatpush1.bf16.msra.mxu0 %v1027
        %1069 = vmatprep.subr.bf16.mxu0 0
        %1070 = vmatpush1.bf16.msra.mxu0 %v1026
        %1071 = vmatprep.subr.bf16.mxu0 0
        %1072 = vmatpush1.bf16.msra.mxu0 %v1025
        %1073 = vmatprep.subr.bf16.mxu0 0
        %1074 = vmatpush2.bf16.msra.mxu0 %v1040
        %1075 = vmatprep.subr.bf16.mxu0 0
        %1076 = vmatpush2.bf16.msra.mxu0 %v1039
        %1077 = vmatprep.subr.bf16.mxu0 0
        %1078 = vmatpush2.bf16.msra.mxu0 %v1038
        %1079 = vmatprep.subr.bf16.mxu0 0
        %1080 = vmatpush2.bf16.msra.mxu0 %v1037
        %1081 = vmatprep.subr.bf16.mxu0 0
        %1082 = vmatpush2.bf16.msra.mxu0 %v1036
        %1083 = vmatprep.subr.bf16.mxu0 0
        %1084 = vmatpush2.bf16.msra.mxu0 %v1035
        %1085 = vmatprep.subr.bf16.mxu0 0
        %1086 = vmatpush2.bf16.msra.mxu0 %v1034
        %1087 = vmatprep.subr.bf16.mxu0 0
        %1088 = vmatpush2.bf16.msra.mxu0 %v1033
        %1089 = vmatprep.mubr.bf16.mxu0 %v946
        %1090 = vmatmul.mubr.bf16.gmra.mxu0 %v945
        %v1091 = vpop.f32.mrf.mxu0
        %v1092 = vadd.f32 0.0, %v1091
        %v1093 = vpop.f32.mrf.mxu0
        %v1094 = vpop.f32.mrf.mxu0
        %v1095 = vadd.f32 0.0, %v1094
        %v1096 = vpop.f32.mrf.mxu0
        %1097 = vmatprep.mubr.bf16.mxu0 %v948
        %1098 = vmatmul.mubr.bf16.gmra.mxu0 %v947
        %v1099 = vpop.f32.mrf.mxu0
        %v1100 = vadd.f32 0.0, %v1099
        %v1101 = vpop.f32.mrf.mxu0
        %v1102 = vpop.f32.mrf.mxu0
        %v1103 = vadd.f32 0.0, %v1102
        %v1104 = vpop.f32.mrf.mxu0
        %1105 = vmatprep.mubr.bf16.mxu0 %v950
        %1106 = vmatmul.mubr.bf16.gmra.mxu0 %v949
        %v1107 = vpop.f32.mrf.mxu0
        %v1108 = vadd.f32 0.0, %v1107
        %v1109 = vpop.f32.mrf.mxu0
        %v1110 = vpop.f32.mrf.mxu0
        %v1111 = vadd.f32 0.0, %v1110
        %v1112 = vpop.f32.mrf.mxu0
        %1113 = vmatprep.mubr.bf16.mxu0 %v952
        %1114 = vmatmul.mubr.bf16.gmra.mxu0 %v951
        %v1115 = vpop.f32.mrf.mxu0
        %v1116 = vadd.f32 0.0, %v1115
        %v1117 = vpop.f32.mrf.mxu0
        %v1118 = vpop.f32.mrf.mxu0
        %v1119 = vadd.f32 0.0, %v1118
        %v1120 = vpop.f32.mrf.mxu0
        %1121 = vdwg.mxu0
        %v1122 = vadd.f32 %v858, %v1092
        %v1123 = vadd.f32 %v861, %v1095
        %v1124 = vadd.f32 %v866, %v1100
        %v1125 = vadd.f32 %v869, %v1103
        %v1126 = vadd.f32 %v874, %v1108
        %v1127 = vadd.f32 %v877, %v1111
        %v1128 = vadd.f32 %v882, %v1116
        %v1129 = vadd.f32 %v885, %v1119
        %v1131 = vshrl.u32 %v363, 16
        %v1133 = vrot.slane %v1131, 4
        %v1134 = vshll.u32 %v363, 16
        %v1136 = vrot.slane %v1134, 5
        %v1137 = vor.u32 %v1133, %v1136
        %v1138 = vrot.slane %v1137, 4
        %v1140 = vshll.u32 %v364, 16
        %v1142 = vrot.slane %v1140, 5
        %v1143 = vsel %vm429, %v1138, %v1142
        %v1145 = vshrl.u32 %v367, 16
        %v1147 = vrot.slane %v1145, 4
        %v1148 = vshll.u32 %v367, 16
        %v1150 = vrot.slane %v1148, 5
        %v1151 = vor.u32 %v1147, %v1150
        %v1152 = vrot.slane %v1151, 4
        %v1154 = vshll.u32 %v368, 16
        %v1156 = vrot.slane %v1154, 5
        %v1157 = vsel %vm429, %v1152, %v1156
        %v1159 = vshrl.u32 %v371, 16
        %v1161 = vrot.slane %v1159, 4
        %v1162 = vshll.u32 %v371, 16
        %v1164 = vrot.slane %v1162, 5
        %v1165 = vor.u32 %v1161, %v1164
        %v1166 = vrot.slane %v1165, 4
        %v1168 = vshll.u32 %v372, 16
        %v1170 = vrot.slane %v1168, 5
        %v1171 = vsel %vm429, %v1166, %v1170
        %v1173 = vshrl.u32 %v375, 16
        %v1175 = vrot.slane %v1173, 4
        %v1176 = vshll.u32 %v375, 16
        %v1178 = vrot.slane %v1176, 5
        %v1179 = vor.u32 %v1175, %v1178
        %v1180 = vrot.slane %v1179, 4
        %v1182 = vshll.u32 %v376, 16
        %v1184 = vrot.slane %v1182, 5
        %v1185 = vsel %vm429, %v1180, %v1184
        %v1187 = vshrl.u32 %v379, 16
        %v1189 = vrot.slane %v1187, 4
        %v1190 = vshll.u32 %v379, 16
        %v1192 = vrot.slane %v1190, 5
        %v1193 = vor.u32 %v1189, %v1192
        %v1194 = vrot.slane %v1193, 4
        %v1196 = vshll.u32 %v380, 16
        %v1198 = vrot.slane %v1196, 5
        %v1199 = vsel %vm429, %v1194, %v1198
        %v1201 = vshrl.u32 %v383, 16
        %v1203 = vrot.slane %v1201, 4
        %v1204 = vshll.u32 %v383, 16
        %v1206 = vrot.slane %v1204, 5
        %v1207 = vor.u32 %v1203, %v1206
        %v1208 = vrot.slane %v1207, 4
        %v1210 = vshll.u32 %v384, 16
        %v1212 = vrot.slane %v1210, 5
        %v1213 = vsel %vm429, %v1208, %v1212
        %v1215 = vshrl.u32 %v387, 16
        %v1217 = vrot.slane %v1215, 4
        %v1218 = vshll.u32 %v387, 16
        %v1220 = vrot.slane %v1218, 5
        %v1221 = vor.u32 %v1217, %v1220
        %v1222 = vrot.slane %v1221, 4
        %v1224 = vshll.u32 %v388, 16
        %v1226 = vrot.slane %v1224, 5
        %v1227 = vsel %vm429, %v1222, %v1226
        %v1229 = vshrl.u32 %v391, 16
        %v1231 = vrot.slane %v1229, 4
        %v1232 = vshll.u32 %v391, 16
        %v1234 = vrot.slane %v1232, 5
        %v1235 = vor.u32 %v1231, %v1234
        %v1236 = vrot.slane %v1235, 4
        %v1238 = vshll.u32 %v392, 16
        %v1240 = vrot.slane %v1238, 5
        %v1241 = vsel %vm429, %v1236, %v1240
        %s1242 = scalar_lea.vmem [#allocation8], 64
        %v1243 = vld [vmem:[%s1242] sm:$0xf]
        %v1244 = vld [vmem:[%s1242 + $0x4] sm:$0xf]
        %v1245 = vld [vmem:[%s1242 + $0x8] sm:$0xf]
        %v1246 = vld [vmem:[%s1242 + $0xc] sm:$0xf]
        %v1247 = vld [vmem:[%s1242 + $0x10] sm:$0xf]
        %v1248 = vld [vmem:[%s1242 + $0x14] sm:$0xf]
        %v1249 = vld [vmem:[%s1242 + $0x18] sm:$0xf]
        %v1250 = vld [vmem:[%s1242 + $0x1c] sm:$0xf]
        %v1251 = vld [vmem:[%s1242 + $0x20] sm:$0xf]
        %v1252 = vld [vmem:[%s1242 + $0x24] sm:$0xf]
        %v1253 = vld [vmem:[%s1242 + $0x28] sm:$0xf]
        %v1254 = vld [vmem:[%s1242 + $0x2c] sm:$0xf]
        %v1255 = vld [vmem:[%s1242 + $0x30] sm:$0xf]
        %v1256 = vld [vmem:[%s1242 + $0x34] sm:$0xf]
        %v1257 = vld [vmem:[%s1242 + $0x38] sm:$0xf]
        %v1258 = vld [vmem:[%s1242 + $0x3c] sm:$0xf]
        %v1259 = vunpack.c.l.b16 %v1143
        %v1260 = vunpack.c.l.b16 %v1157
        %v1261 = vunpack.c.l.b16 %v1171
        %v1262 = vunpack.c.l.b16 %v1185
        %v1263 = vunpack.c.l.b16 %v1199
        %v1264 = vunpack.c.l.b16 %v1213
        %v1265 = vunpack.c.l.b16 %v1227
        %v1266 = vunpack.c.l.b16 %v1241
        %v1267 = vpack.c.b16 %v1260, %v1259
        %v1268 = vpack.c.b16 %v1262, %v1261
        %v1269 = vpack.c.b16 %v1264, %v1263
        %v1270 = vpack.c.b16 %v1266, %v1265
        %v1291 = vunpack.c.l.b16 %v1243
        %v1292 = vunpack.c.l.b16 %v1244
        %v1293 = vunpack.c.l.b16 %v1245
        %v1294 = vunpack.c.l.b16 %v1246
        %v1295 = vunpack.c.l.b16 %v1247
        %v1296 = vunpack.c.l.b16 %v1248
        %v1297 = vunpack.c.l.b16 %v1249
        %v1298 = vunpack.c.l.b16 %v1250
        %v1299 = vunpack.c.l.b16 %v1251
        %v1300 = vunpack.c.l.b16 %v1252
        %v1301 = vunpack.c.l.b16 %v1253
        %v1302 = vunpack.c.l.b16 %v1254
        %v1303 = vunpack.c.l.b16 %v1255
        %v1304 = vunpack.c.l.b16 %v1256
        %v1305 = vunpack.c.l.b16 %v1257
        %v1306 = vunpack.c.l.b16 %v1258
        %v1307 = vpack.c.b16 %v1292, %v1291
        %v1308 = vpack.c.b16 %v1294, %v1293
        %v1309 = vpack.c.b16 %v1296, %v1295
        %v1310 = vpack.c.b16 %v1298, %v1297
        %v1311 = vpack.c.b16 %v1300, %v1299
        %v1312 = vpack.c.b16 %v1302, %v1301
        %v1313 = vpack.c.b16 %v1304, %v1303
        %v1314 = vpack.c.b16 %v1306, %v1305
        %1323 = vmatprep.subr.bf16.mxu0 0
        %1324 = vmatpush1.bf16.msra.mxu0 %v1314
        %1325 = vmatprep.subr.bf16.mxu0 0
        %1326 = vmatpush1.bf16.msra.mxu0 %v1313
        %1327 = vmatprep.subr.bf16.mxu0 0
        %1328 = vmatpush1.bf16.msra.mxu0 %v1312
        %1329 = vmatprep.subr.bf16.mxu0 0
        %1330 = vmatpush1.bf16.msra.mxu0 %v1311
        %1331 = vmatprep.subr.bf16.mxu0 0
        %1332 = vmatpush1.bf16.msra.mxu0 %v1310
        %1333 = vmatprep.subr.bf16.mxu0 0
        %1334 = vmatpush1.bf16.msra.mxu0 %v1309
        %1335 = vmatprep.subr.bf16.mxu0 0
        %1336 = vmatpush1.bf16.msra.mxu0 %v1308
        %1337 = vmatprep.subr.bf16.mxu0 0
        %1338 = vmatpush1.bf16.msra.mxu0 %v1307
        %1339 = vmatprep.subr.bf16.mxu0 0
        %1340 = vmatpush2.bf16.msra.mxu0 0
        %1341 = vmatprep.subr.bf16.mxu0 0
        %1342 = vmatpush2.bf16.msra.mxu0 0
        %1343 = vmatprep.subr.bf16.mxu0 0
        %1344 = vmatpush2.bf16.msra.mxu0 0
        %1345 = vmatprep.subr.bf16.mxu0 0
        %1346 = vmatpush2.bf16.msra.mxu0 0
        %1347 = vmatprep.subr.bf16.mxu0 0
        %1348 = vmatpush2.bf16.msra.mxu0 0
        %1349 = vmatprep.subr.bf16.mxu0 0
        %1350 = vmatpush2.bf16.msra.mxu0 0
        %1351 = vmatprep.subr.bf16.mxu0 0
        %1352 = vmatpush2.bf16.msra.mxu0 0
        %1353 = vmatprep.subr.bf16.mxu0 0
        %1354 = vmatpush2.bf16.msra.mxu0 0
        %1355 = vmatprep.mubr.bf16.mxu0 0
        %1356 = vmatmul.mubr.bf16.gmra.mxu0 %v1267
        %v1357 = vpop.f32.mrf.mxu0
        %v1358 = vadd.f32 0.0, %v1357
        %v1359 = vpop.f32.mrf.mxu0
        %v1360 = vpop.f32.mrf.mxu0
        %v1361 = vadd.f32 0.0, %v1360
        %v1362 = vpop.f32.mrf.mxu0
        %1363 = vmatprep.mubr.bf16.mxu0 0
        %1364 = vmatmul.mubr.bf16.gmra.mxu0 %v1268
        %v1365 = vpop.f32.mrf.mxu0
        %v1366 = vadd.f32 0.0, %v1365
        %v1367 = vpop.f32.mrf.mxu0
        %v1368 = vpop.f32.mrf.mxu0
        %v1369 = vadd.f32 0.0, %v1368
        %v1370 = vpop.f32.mrf.mxu0
        %1371 = vmatprep.mubr.bf16.mxu0 0
        %1372 = vmatmul.mubr.bf16.gmra.mxu0 %v1269
        %v1373 = vpop.f32.mrf.mxu0
        %v1374 = vadd.f32 0.0, %v1373
        %v1375 = vpop.f32.mrf.mxu0
        %v1376 = vpop.f32.mrf.mxu0
        %v1377 = vadd.f32 0.0, %v1376
        %v1378 = vpop.f32.mrf.mxu0
        %1379 = vmatprep.mubr.bf16.mxu0 0
        %1380 = vmatmul.mubr.bf16.gmra.mxu0 %v1270
        %v1381 = vpop.f32.mrf.mxu0
        %v1382 = vadd.f32 0.0, %v1381
        %v1383 = vpop.f32.mrf.mxu0
        %v1384 = vpop.f32.mrf.mxu0
        %v1385 = vadd.f32 0.0, %v1384
        %v1386 = vpop.f32.mrf.mxu0
        %1387 = vdwg.mxu0
        %v1388 = vadd.f32 %v1122, %v1358
        %v1389 = vadd.f32 %v1123, %v1361
        %v1390 = vadd.f32 %v1124, %v1366
        %v1391 = vadd.f32 %v1125, %v1369
        %v1392 = vadd.f32 %v1126, %v1374
        %v1393 = vadd.f32 %v1127, %v1377
        %v1394 = vadd.f32 %v1128, %v1382
        %v1395 = vadd.f32 %v1129, %v1385
        %s1396 = scalar_lea.vmem [#allocation7], 256
        %v1397 = vld [vmem:[%s1396] sm:$0xf]
        %v1398 = vld [vmem:[%s1396 + $0x4] sm:$0xf]
        %v1399 = vld [vmem:[%s1396 + $0x8] sm:$0xf]
        %v1400 = vld [vmem:[%s1396 + $0xc] sm:$0xf]
        %v1401 = vld [vmem:[%s1396 + $0x10] sm:$0xf]
        %v1402 = vld [vmem:[%s1396 + $0x14] sm:$0xf]
        %v1403 = vld [vmem:[%s1396 + $0x18] sm:$0xf]
        %v1404 = vld [vmem:[%s1396 + $0x1c] sm:$0xf]
        %v1405 = vld [vmem:[%s1396 + $0x20] sm:$0xf]
        %v1406 = vld [vmem:[%s1396 + $0x24] sm:$0xf]
        %v1407 = vld [vmem:[%s1396 + $0x28] sm:$0xf]
        %v1408 = vld [vmem:[%s1396 + $0x2c] sm:$0xf]
        %v1409 = vld [vmem:[%s1396 + $0x30] sm:$0xf]
        %v1410 = vld [vmem:[%s1396 + $0x34] sm:$0xf]
        %v1411 = vld [vmem:[%s1396 + $0x38] sm:$0xf]
        %v1412 = vld [vmem:[%s1396 + $0x3c] sm:$0xf]
        %v1413 = vld [vmem:[%s1396 + $0x40] sm:$0xf]
        %v1414 = vld [vmem:[%s1396 + $0x44] sm:$0xf]
        %v1415 = vld [vmem:[%s1396 + $0x48] sm:$0xf]
        %v1416 = vld [vmem:[%s1396 + $0x4c] sm:$0xf]
        %v1417 = vld [vmem:[%s1396 + $0x50] sm:$0xf]
        %v1418 = vld [vmem:[%s1396 + $0x54] sm:$0xf]
        %v1419 = vld [vmem:[%s1396 + $0x58] sm:$0xf]
        %v1420 = vld [vmem:[%s1396 + $0x5c] sm:$0xf]
        %v1421 = vld [vmem:[%s1396 + $0x60] sm:$0xf]
        %v1422 = vld [vmem:[%s1396 + $0x64] sm:$0xf]
        %v1423 = vld [vmem:[%s1396 + $0x68] sm:$0xf]
        %v1424 = vld [vmem:[%s1396 + $0x6c] sm:$0xf]
        %v1425 = vld [vmem:[%s1396 + $0x70] sm:$0xf]
        %v1426 = vld [vmem:[%s1396 + $0x74] sm:$0xf]
        %v1427 = vld [vmem:[%s1396 + $0x78] sm:$0xf]
        %v1428 = vld [vmem:[%s1396 + $0x7c] sm:$0xf]
        %v1430 = vunpack.c.l.b16 %v393
        %v1431 = vunpack.c.h.b16 %v393
        %v1432 = vpack.c.b16 %v699, %v697
        %v1433 = vpack.c.b16 %v700, %v698
        %v1434 = vpack.c.b16 %v703, %v701
        %v1435 = vpack.c.b16 %v704, %v702
        %v1436 = vpack.c.b16 %v707, %v705
        %v1437 = vpack.c.b16 %v708, %v706
        %v1438 = vpack.c.b16 %v1430, %v709
        %v1439 = vpack.c.b16 %v1431, %v710
        %v1480 = vunpack.c.l.b16 %v1397
        %v1481 = vunpack.c.l.b16 %v1398
        %v1482 = vunpack.c.l.b16 %v1399
        %v1483 = vunpack.c.l.b16 %v1400
        %v1484 = vunpack.c.l.b16 %v1401
        %v1485 = vunpack.c.l.b16 %v1402
        %v1486 = vunpack.c.l.b16 %v1403
        %v1487 = vunpack.c.l.b16 %v1404
        %v1488 = vunpack.c.l.b16 %v1405
        %v1489 = vunpack.c.l.b16 %v1406
        %v1490 = vunpack.c.l.b16 %v1407
        %v1491 = vunpack.c.l.b16 %v1408
        %v1492 = vunpack.c.l.b16 %v1409
        %v1493 = vunpack.c.l.b16 %v1410
        %v1494 = vunpack.c.l.b16 %v1411
        %v1495 = vunpack.c.l.b16 %v1412
        %v1496 = vunpack.c.l.b16 %v1413
        %v1497 = vunpack.c.l.b16 %v1414
        %v1498 = vunpack.c.l.b16 %v1415
        %v1499 = vunpack.c.l.b16 %v1416
        %v1500 = vunpack.c.l.b16 %v1417
        %v1501 = vunpack.c.l.b16 %v1418
        %v1502 = vunpack.c.l.b16 %v1419
        %v1503 = vunpack.c.l.b16 %v1420
        %v1504 = vunpack.c.l.b16 %v1421
        %v1505 = vunpack.c.l.b16 %v1422
        %v1506 = vunpack.c.l.b16 %v1423
        %v1507 = vunpack.c.l.b16 %v1424
        %v1508 = vunpack.c.l.b16 %v1425
        %v1509 = vunpack.c.l.b16 %v1426
        %v1510 = vunpack.c.l.b16 %v1427
        %v1511 = vunpack.c.l.b16 %v1428
        %v1512 = vpack.c.b16 %v1481, %v1480
        %v1513 = vpack.c.b16 %v1483, %v1482
        %v1514 = vpack.c.b16 %v1485, %v1484
        %v1515 = vpack.c.b16 %v1487, %v1486
        %v1516 = vpack.c.b16 %v1489, %v1488
        %v1517 = vpack.c.b16 %v1491, %v1490
        %v1518 = vpack.c.b16 %v1493, %v1492
        %v1519 = vpack.c.b16 %v1495, %v1494
        %v1520 = vpack.c.b16 %v1497, %v1496
        %v1521 = vpack.c.b16 %v1499, %v1498
        %v1522 = vpack.c.b16 %v1501, %v1500
        %v1523 = vpack.c.b16 %v1503, %v1502
        %v1524 = vpack.c.b16 %v1505, %v1504
        %v1525 = vpack.c.b16 %v1507, %v1506
        %v1526 = vpack.c.b16 %v1509, %v1508
        %v1527 = vpack.c.b16 %v1511, %v1510
        %1544 = vmatprep.subr.bf16.mxu0 0
        %1545 = vmatpush1.bf16.msra.mxu0 %v1519
        %1546 = vmatprep.subr.bf16.mxu0 0
        %1547 = vmatpush1.bf16.msra.mxu0 %v1518
        %1548 = vmatprep.subr.bf16.mxu0 0
        %1549 = vmatpush1.bf16.msra.mxu0 %v1517
        %1550 = vmatprep.subr.bf16.mxu0 0
        %1551 = vmatpush1.bf16.msra.mxu0 %v1516
        %1552 = vmatprep.subr.bf16.mxu0 0
        %1553 = vmatpush1.bf16.msra.mxu0 %v1515
        %1554 = vmatprep.subr.bf16.mxu0 0
        %1555 = vmatpush1.bf16.msra.mxu0 %v1514
        %1556 = vmatprep.subr.bf16.mxu0 0
        %1557 = vmatpush1.bf16.msra.mxu0 %v1513
        %1558 = vmatprep.subr.bf16.mxu0 0
        %1559 = vmatpush1.bf16.msra.mxu0 %v1512
        %1560 = vmatprep.subr.bf16.mxu0 0
        %1561 = vmatpush2.bf16.msra.mxu0 %v1527
        %1562 = vmatprep.subr.bf16.mxu0 0
        %1563 = vmatpush2.bf16.msra.mxu0 %v1526
        %1564 = vmatprep.subr.bf16.mxu0 0
        %1565 = vmatpush2.bf16.msra.mxu0 %v1525
        %1566 = vmatprep.subr.bf16.mxu0 0
        %1567 = vmatpush2.bf16.msra.mxu0 %v1524
        %1568 = vmatprep.subr.bf16.mxu0 0
        %1569 = vmatpush2.bf16.msra.mxu0 %v1523
        %1570 = vmatprep.subr.bf16.mxu0 0
        %1571 = vmatpush2.bf16.msra.mxu0 %v1522
        %1572 = vmatprep.subr.bf16.mxu0 0
        %1573 = vmatpush2.bf16.msra.mxu0 %v1521
        %1574 = vmatprep.subr.bf16.mxu0 0
        %1575 = vmatpush2.bf16.msra.mxu0 %v1520
        %1576 = vmatprep.mubr.bf16.mxu0 %v1433
        %1577 = vmatmul.mubr.bf16.gmra.mxu0 %v1432
        %v1578 = vpop.f32.mrf.mxu0
        %v1579 = vadd.f32 0.0, %v1578
        %v1580 = vpop.f32.mrf.mxu0
        %v1581 = vpop.f32.mrf.mxu0
        %v1582 = vadd.f32 0.0, %v1581
        %v1583 = vpop.f32.mrf.mxu0
        %1584 = vmatprep.mubr.bf16.mxu0 %v1435
        %1585 = vmatmul.mubr.bf16.gmra.mxu0 %v1434
        %v1586 = vpop.f32.mrf.mxu0
        %v1587 = vadd.f32 0.0, %v1586
        %v1588 = vpop.f32.mrf.mxu0
        %v1589 = vpop.f32.mrf.mxu0
        %v1590 = vadd.f32 0.0, %v1589
        %v1591 = vpop.f32.mrf.mxu0
        %1592 = vmatprep.mubr.bf16.mxu0 %v1437
        %1593 = vmatmul.mubr.bf16.gmra.mxu0 %v1436
        %v1594 = vpop.f32.mrf.mxu0
        %v1595 = vadd.f32 0.0, %v1594
        %v1596 = vpop.f32.mrf.mxu0
        %v1597 = vpop.f32.mrf.mxu0
        %v1598 = vadd.f32 0.0, %v1597
        %v1599 = vpop.f32.mrf.mxu0
        %1600 = vmatprep.mubr.bf16.mxu0 %v1439
        %1601 = vmatmul.mubr.bf16.gmra.mxu0 %v1438
        %v1602 = vpop.f32.mrf.mxu0
        %v1603 = vadd.f32 0.0, %v1602
        %v1604 = vpop.f32.mrf.mxu0
        %v1605 = vpop.f32.mrf.mxu0
        %v1606 = vadd.f32 0.0, %v1605
        %v1607 = vpop.f32.mrf.mxu0
        %1608 = vdwg.mxu0
        %v1609 = vadd.f32 %v1388, %v1579
        %v1610 = vadd.f32 %v1389, %v1582
        %v1611 = vadd.f32 %v1390, %v1587
        %v1612 = vadd.f32 %v1391, %v1590
        %v1613 = vadd.f32 %v1392, %v1595
        %v1614 = vadd.f32 %v1393, %v1598
        %v1615 = vadd.f32 %v1394, %v1603
        %v1616 = vadd.f32 %v1395, %v1606
        %v1618 = vshrl.u32 %v393, 16
        %v1620 = vrot.slane %v1618, 4
        %v1621 = vshll.u32 %v393, 16
        %v1623 = vrot.slane %v1621, 5
        %v1624 = vor.u32 %v1620, %v1623
        %v1625 = vrot.slane %v1624, 4
        %v1627 = vshll.u32 %v394, 16
        %v1629 = vrot.slane %v1627, 5
        %v1630 = vsel %vm429, %v1625, %v1629
        %s1631 = scalar_lea.vmem [#allocation8], 128
        %v1632 = vld [vmem:[%s1631] sm:$0xf]
        %v1633 = vld [vmem:[%s1631 + $0x4] sm:$0xf]
        %v1634 = vld [vmem:[%s1631 + $0x8] sm:$0xf]
        %v1635 = vld [vmem:[%s1631 + $0xc] sm:$0xf]
        %v1636 = vld [vmem:[%s1631 + $0x10] sm:$0xf]
        %v1637 = vld [vmem:[%s1631 + $0x14] sm:$0xf]
        %v1638 = vld [vmem:[%s1631 + $0x18] sm:$0xf]
        %v1639 = vld [vmem:[%s1631 + $0x1c] sm:$0xf]
        %v1640 = vld [vmem:[%s1631 + $0x20] sm:$0xf]
        %v1641 = vld [vmem:[%s1631 + $0x24] sm:$0xf]
        %v1642 = vld [vmem:[%s1631 + $0x28] sm:$0xf]
        %v1643 = vld [vmem:[%s1631 + $0x2c] sm:$0xf]
        %v1644 = vld [vmem:[%s1631 + $0x30] sm:$0xf]
        %v1645 = vld [vmem:[%s1631 + $0x34] sm:$0xf]
        %v1646 = vld [vmem:[%s1631 + $0x38] sm:$0xf]
        %v1647 = vld [vmem:[%s1631 + $0x3c] sm:$0xf]
        %v1648 = vunpack.c.l.b16 %v1630
        %v1649 = vpack.c.b16 %v560, %v559
        %v1650 = vpack.c.b16 %v562, %v561
        %v1651 = vpack.c.b16 %v564, %v563
        %v1652 = vpack.c.b16 %v1648, %v565
        %v1673 = vunpack.c.l.b16 %v1632
        %v1674 = vunpack.c.l.b16 %v1633
        %v1675 = vunpack.c.l.b16 %v1634
        %v1676 = vunpack.c.l.b16 %v1635
        %v1677 = vunpack.c.l.b16 %v1636
        %v1678 = vunpack.c.l.b16 %v1637
        %v1679 = vunpack.c.l.b16 %v1638
        %v1680 = vunpack.c.l.b16 %v1639
        %v1681 = vunpack.c.l.b16 %v1640
        %v1682 = vunpack.c.l.b16 %v1641
        %v1683 = vunpack.c.l.b16 %v1642
        %v1684 = vunpack.c.l.b16 %v1643
        %v1685 = vunpack.c.l.b16 %v1644
        %v1686 = vunpack.c.l.b16 %v1645
        %v1687 = vunpack.c.l.b16 %v1646
        %v1688 = vunpack.c.l.b16 %v1647
        %v1689 = vpack.c.b16 %v1674, %v1673
        %v1690 = vpack.c.b16 %v1676, %v1675
        %v1691 = vpack.c.b16 %v1678, %v1677
        %v1692 = vpack.c.b16 %v1680, %v1679
        %v1693 = vpack.c.b16 %v1682, %v1681
        %v1694 = vpack.c.b16 %v1684, %v1683
        %v1695 = vpack.c.b16 %v1686, %v1685
        %v1696 = vpack.c.b16 %v1688, %v1687
        %1705 = vmatprep.subr.bf16.mxu0 0
        %1706 = vmatpush1.bf16.msra.mxu0 %v1696
        %1707 = vmatprep.subr.bf16.mxu0 0
        %1708 = vmatpush1.bf16.msra.mxu0 %v1695
        %1709 = vmatprep.subr.bf16.mxu0 0
        %1710 = vmatpush1.bf16.msra.mxu0 %v1694
        %1711 = vmatprep.subr.bf16.mxu0 0
        %1712 = vmatpush1.bf16.msra.mxu0 %v1693
        %1713 = vmatprep.subr.bf16.mxu0 0
        %1714 = vmatpush1.bf16.msra.mxu0 %v1692
        %1715 = vmatprep.subr.bf16.mxu0 0
        %1716 = vmatpush1.bf16.msra.mxu0 %v1691
        %1717 = vmatprep.subr.bf16.mxu0 0
        %1718 = vmatpush1.bf16.msra.mxu0 %v1690
        %1719 = vmatprep.subr.bf16.mxu0 0
        %1720 = vmatpush1.bf16.msra.mxu0 %v1689
        %1721 = vmatprep.subr.bf16.mxu0 0
        %1722 = vmatpush2.bf16.msra.mxu0 0
        %1723 = vmatprep.subr.bf16.mxu0 0
        %1724 = vmatpush2.bf16.msra.mxu0 0
        %1725 = vmatprep.subr.bf16.mxu0 0
        %1726 = vmatpush2.bf16.msra.mxu0 0
        %1727 = vmatprep.subr.bf16.mxu0 0
        %1728 = vmatpush2.bf16.msra.mxu0 0
        %1729 = vmatprep.subr.bf16.mxu0 0
        %1730 = vmatpush2.bf16.msra.mxu0 0
        %1731 = vmatprep.subr.bf16.mxu0 0
        %1732 = vmatpush2.bf16.msra.mxu0 0
        %1733 = vmatprep.subr.bf16.mxu0 0
        %1734 = vmatpush2.bf16.msra.mxu0 0
        %1735 = vmatprep.subr.bf16.mxu0 0
        %1736 = vmatpush2.bf16.msra.mxu0 0
        %1737 = vmatprep.mubr.bf16.mxu0 0
        %1738 = vmatmul.mubr.bf16.gmra.mxu0 %v1649
        %v1739 = vpop.f32.mrf.mxu0
        %v1740 = vadd.f32 0.0, %v1739
        %v1741 = vpop.f32.mrf.mxu0
        %v1742 = vpop.f32.mrf.mxu0
        %v1743 = vadd.f32 0.0, %v1742
        %v1744 = vpop.f32.mrf.mxu0
        %1745 = vmatprep.mubr.bf16.mxu0 0
        %1746 = vmatmul.mubr.bf16.gmra.mxu0 %v1650
        %v1747 = vpop.f32.mrf.mxu0
        %v1748 = vadd.f32 0.0, %v1747
        %v1749 = vpop.f32.mrf.mxu0
        %v1750 = vpop.f32.mrf.mxu0
        %v1751 = vadd.f32 0.0, %v1750
        %v1752 = vpop.f32.mrf.mxu0
        %1753 = vmatprep.mubr.bf16.mxu0 0
        %1754 = vmatmul.mubr.bf16.gmra.mxu0 %v1651
        %v1755 = vpop.f32.mrf.mxu0
        %v1756 = vadd.f32 0.0, %v1755
        %v1757 = vpop.f32.mrf.mxu0
        %v1758 = vpop.f32.mrf.mxu0
        %v1759 = vadd.f32 0.0, %v1758
        %v1760 = vpop.f32.mrf.mxu0
        %1761 = vmatprep.mubr.bf16.mxu0 0
        %1762 = vmatmul.mubr.bf16.gmra.mxu0 %v1652
        %v1763 = vpop.f32.mrf.mxu0
        %v1764 = vadd.f32 0.0, %v1763
        %v1765 = vpop.f32.mrf.mxu0
        %v1766 = vpop.f32.mrf.mxu0
        %v1767 = vadd.f32 0.0, %v1766
        %v1768 = vpop.f32.mrf.mxu0
        %1769 = vdwg.mxu0
        %v1770 = vadd.f32 %v1609, %v1740
        %v1771 = vadd.f32 %v1610, %v1743
        %v1772 = vadd.f32 %v1611, %v1748
        %v1773 = vadd.f32 %v1612, %v1751
        %v1774 = vadd.f32 %v1613, %v1756
        %v1775 = vadd.f32 %v1614, %v1759
        %v1776 = vadd.f32 %v1615, %v1764
        %v1777 = vadd.f32 %v1616, %v1767
        %v1778 = vld [vmem:[%s4] sm:$0x1]
        %v1780 = vlaneseq
        %v1781 = vshrl.u32 %v1780, 7
        %v1782 = vsub.s32 0, %v1781
        %v1783 = vrot.slane %v1778, %v1782
        %v1785 = vadd.f32 %v1770, %v1783
        %v1786 = vadd.f32 %v1771, %v1783
        %v1787 = vadd.f32 %v1772, %v1783
        %v1788 = vadd.f32 %v1773, %v1783
        %v1789 = vadd.f32 %v1774, %v1783
        %v1790 = vadd.f32 %v1775, %v1783
        %v1791 = vadd.f32 %v1776, %v1783
        %v1792 = vadd.f32 %v1777, %v1783
        %1793 = vst [vmem:[%s349] sm:$0xff] %v1785
        %1794 = vst [vmem:[%s349 + $0x8] sm:$0xff] %v1786
        %1795 = vst [vmem:[%s349 + $0x10] sm:$0xff] %v1787
        %1796 = vst [vmem:[%s349 + $0x18] sm:$0xff] %v1788
        %1797 = vst [vmem:[%s349 + $0x20] sm:$0xff] %v1789
        %1798 = vst [vmem:[%s349 + $0x28] sm:$0xff] %v1790
        %1799 = vst [vmem:[%s349 + $0x30] sm:$0xff] %v1791
        %1800 = vst [vmem:[%s349 + $0x38] sm:$0xff] %v1792
        %s1801 = sand.u32 %s171, 1
        %s1802 = scalar_lea.sflag [#allocation4], %s1801
        %s1803 = sand.u32 %s171, 1
        %s1804 = smul.addr %s1803, 64
        %s1805 = scalar_lea.vmem [#allocation10], %s1804
        // Predicated region
        $region57: #{tpu_custom_call.1} parent=39 // pred_check
          %p1806 = pneg %p181
        $region58: #{tpu_custom_call.1} parent=39 // pred_check_branch
          %1808 = sbr.rel (%p1806) target = $region60
        $region59: #{tpu_custom_call.1} parent=39 // pred_region
          %s1809 = smul.u32 8, %s31
          %s1811 = ssub.s32 1024, 1024
          %1812 = vsyncadd %s1802, %s1811
          %s1813 = smul.addr %s30, 8
          %s1814 = sadd.s32 %s1809, %s1813
          %s1815 = smul.addr %s1814, 128
          %s1816 = scalar_lea.hbm %s5, %s1815
          %s1817 = sshll.u32 %s1805, 4
          %s1818 = int_to_ptr.vmem [resolvable:$true] %s1817
          %1823 = dma.vmem_to_hbm [thread:$0]  %s1818, 1024, %s1816, %s1802, 128, 128, 8
        $region60: #{tpu_custom_call.1} parent=39 // pred_fallthru
          _
      $region40: #{tpu_custom_call.1} parent=5 // pred_fallthru
        _
      %p1824 = scmp.le.s32.totalorder 2, %s21
      // Predicated region
      $region61: #{tpu_custom_call.1} parent=5 // pred_check
        %p1825 = pneg %p1824
      $region62: #{tpu_custom_call.1} parent=5 // pred_check_branch
        %1827 = sbr.rel (%p1825) target = $region64
      $region63: #{tpu_custom_call.1} parent=5 // pred_region
        %s1828 = ssub.s32 %s21, 2
        // Predicated region
        $region65: #{tpu_custom_call.1} parent=63 // pred_check
          %p1829 = pneg %p187
        $region66: #{tpu_custom_call.1} parent=63 // pred_check_branch
          %1831 = sbr.rel (%p1829) target = $region68
        $region67: #{tpu_custom_call.1} parent=63 // pred_region
          %s1832 = sand.u32 %s172, 1
          %s1833 = scalar_lea.sflag [#allocation4], %s1832
          %s1834 = sand.u32 %s172, 1
          %s1835 = smul.addr %s1834, 64
          %s1836 = scalar_lea.vmem [#allocation10], %s1835
          %1837 = dma.done %s1833, 1024
        $region68: #{tpu_custom_call.1} parent=63 // pred_fallthru
          _
      $region64: #{tpu_custom_call.1} parent=5 // pred_fallthru
        _
    $region6: #{tpu_custom_call.1} parent=1 // loop_footer
      %s25 = sadd.s32 1, %s21
    $region7: #{tpu_custom_call.1} parent=1 // loop_footer_branch
      %20 = sbr.rel target = $region3
    $region8: #{tpu_custom_call.1} parent=1 // loop_exit
      _
    %1838 = vsyncpa [#allocation3], 1
    %s1839 = scalar_lea.sflag [#allocation3], 1
    %1840 = vsyncpa %s1839, 1
    %1841 = vsyncpa [#allocation6], 1
    %s1842 = scalar_lea.sflag [#allocation6], 1
    %1843 = vsyncpa %s1842, 1
    %1844 = vsyncpa [#allocation9], 1
    %1845 = vsyncpa [#allocation4], 1
    %s1846 = scalar_lea.sflag [#allocation4], 1
    %1847 = vsyncpa %s1846, 1

</llo_original>
